<compile_context>
chip_gen: v7x
topology: tpu7x:2x2x1
jax: 0.10.0
libtpu: 0.0.40
codegen_flags: <defaults>
</compile_context>

<pallas_src>
import jax
import jax.numpy as jnp
from jax.experimental import pallas as pl
from jax.experimental.pallas import tpu as pltpu


IN_FEATURES = 28 * 28      # 784 (full last dim of x -> legal un-tiled block width)
HIDDEN = 512
OUT_FEATURES = 10
OUT_PAD = 128              # lane-dense output (unmasked vst); sliced to 10 in wrapper
TB_MAX = 1024              # max batch tile; ~19 MiB VMEM at tb=1024 incl. double buffers
VMEM_LIMIT_BYTES = 48 * 1024 * 1024   # > v5e 16 MiB default, < v7x 64 MiB physical


def _cdiv(a, b):
    return (a + b - 1) // b


def _round_up(x, m):
    return ((x + m - 1) // m) * m


def _mlp_kernel(x_ref, w1_ref, b1_ref, w2_ref, b2_ref, w3_ref, b3_ref, o_ref):
    # x_ref: (tb, 784) f32 ; w*: bf16 ; b*: f32 ; o_ref: (tb, 128) f32
    # Cast x to bf16 in VMEM (keeps HBM traffic to a single f32 read of x).
    x = x_ref[...].astype(jnp.bfloat16)
    h1 = jnp.dot(x, w1_ref[...], preferred_element_type=jnp.float32) + b1_ref[...]
    h1 = jnp.maximum(h1, 0.0).astype(jnp.bfloat16)
    h2 = jnp.dot(h1, w2_ref[...], preferred_element_type=jnp.float32) + b2_ref[...]
    h2 = jnp.maximum(h2, 0.0).astype(jnp.bfloat16)
    logits = jnp.dot(h2, w3_ref[...], preferred_element_type=jnp.float32) + b3_ref[...]
    o_ref[...] = logits.astype(o_ref.dtype)


def prepare_params(params):
    """One-time conversion of params to kernel layout (hoisted out of the
    per-call path): bf16 weights, f32 biases, layer-3 N padded 10 -> 128."""
    return {
        "w1": params["w1"].astype(jnp.bfloat16),                            # (784, 512)
        "b1": params["b1"].reshape(1, HIDDEN).astype(jnp.float32),          # (1, 512)
        "w2": params["w2"].astype(jnp.bfloat16),                            # (512, 512)
        "b2": params["b2"].reshape(1, HIDDEN).astype(jnp.float32),          # (1, 512)
        "w3": jnp.pad(params["w3"], ((0, 0), (0, OUT_PAD - OUT_FEATURES))
                      ).astype(jnp.bfloat16),                               # (512, 128)
        "b3": jnp.pad(params["b3"].reshape(1, OUT_FEATURES),
                      ((0, 0), (0, OUT_PAD - OUT_FEATURES))
                      ).astype(jnp.float32),                                # (1, 128)
    }


@jax.jit
def neural_network_forward(x_nchw, prepared):
    """Forward pass matching NeuralNetwork.forward.

    x_nchw:   (B, 1, 28, 28) float32 (NCHW, like PyTorch)
    prepared: output of prepare_params()
    returns:  (B, 10) float32 logits
    """
    B = x_nchw.shape[0]

    # nn.Flatten(): row-major flatten of (C, H, W); metadata-only for contiguous x.
    x = x_nchw.reshape(B, IN_FEATURES).astype(jnp.float32)

    # Balanced batch-tile selection:
    #   * cap at TB_MAX,
    #   * spread B over ceil(B / TB_MAX) tiles (padding waste < 8 rows/tile),
    #   * force >= 2 grid steps when B >= 16 so the "parallel" batch axis can
    #     use both TensorCores on v7x (no cost on single-TC v5e/v6e).
    num_tiles = max(_cdiv(B, TB_MAX), 2 if B >= 16 else 1)
    tb = _round_up(_cdiv(B, num_tiles), 8)
    grid = _cdiv(B, tb)          # boundary block is clipped by the pipeline

    out = pl.pallas_call(
        _mlp_kernel,
        out_shape=jax.ShapeDtypeStruct((B, OUT_PAD), jnp.float32),
        grid_spec=pltpu.PrefetchScalarGridSpec(
            num_scalar_prefetch=0,
            grid=(grid,),
            in_specs=[
                # batch-tiled activations (unpadded: full 784-wide last dim)
                pl.BlockSpec((tb, IN_FEATURES), lambda i: (i, 0)),
                # weights / biases: resident (constant block index across the grid)
                pl.BlockSpec((IN_FEATURES, HIDDEN), lambda i: (0, 0)),
                pl.BlockSpec((1, HIDDEN), lambda i: (0, 0)),
                pl.BlockSpec((HIDDEN, HIDDEN), lambda i: (0, 0)),
                pl.BlockSpec((1, HIDDEN), lambda i: (0, 0)),
                pl.BlockSpec((HIDDEN, OUT_PAD), lambda i: (0, 0)),
                pl.BlockSpec((1, OUT_PAD), lambda i: (0, 0)),
            ],
            out_specs=pl.BlockSpec((tb, OUT_PAD), lambda i: (i, 0)),
        ),
        compiler_params=pltpu.CompilerParams(
            dimension_semantics=("parallel",),      # shard batch tiles across TCs (v7x)
            vmem_limit_bytes=VMEM_LIMIT_BYTES,      # tb=1024 tile > v5e's 16 MiB default
        ),
    )(x, prepared["w1"], prepared["b1"], prepared["w2"], prepared["b2"],
      prepared["w3"], prepared["b3"])

    # Strip the lane padding of the logits.
    return out[:, :OUT_FEATURES]


def init_params(key):
    """Deterministic init mimicking PyTorch's default Linear init
    (uniform in +/- 1/sqrt(fan_in)).  Weights stored as (in, out)."""
    def linear(key, fan_in, fan_out):
        kw, kb = jax.random.split(key)
        bound = 1.0 / jnp.sqrt(jnp.float32(fan_in))
        w = jax.random.uniform(kw, (fan_in, fan_out), jnp.float32, -bound, bound)
        b = jax.random.uniform(kb, (1, fan_out), jnp.float32, -bound, bound)
        return w, b

    k1, k2, k3 = jax.random.split(key, 3)
    w1, b1 = linear(k1, IN_FEATURES, HIDDEN)
    w2, b2 = linear(k2, HIDDEN, HIDDEN)
    w3, b3 = linear(k3, HIDDEN, OUT_FEATURES)
    return {"w1": w1, "b1": b1, "w2": w2, "b2": b2, "w3": w3, "b3": b3}


if __name__ == "__main__":
    key = jax.random.PRNGKey(0)
    k_params, k_x1, k_x2 = jax.random.split(key, 3)

    params = init_params(k_params)
    prepared = prepare_params(params)   # one-time weight prep, reused across calls

    def ref_bf16(xf):   # reference with identical precision (bf16 operands, f32 acc)
        xb = xf.astype(jnp.bfloat16)
        h1 = jnp.maximum(jnp.dot(xb, params["w1"].astype(jnp.bfloat16),
                                 preferred_element_type=jnp.float32) + params["b1"], 0.0)
        h2 = jnp.maximum(jnp.dot(h1.astype(jnp.bfloat16), params["w2"].astype(jnp.bfloat16),
                                 preferred_element_type=jnp.float32) + params["b2"], 0.0)
        return jnp.dot(h2.astype(jnp.bfloat16), params["w3"].astype(jnp.bfloat16),
                       preferred_element_type=jnp.float32) + params["b3"]

    def ref_f32(xf):    # full-precision semantic reference
        h1 = jnp.maximum(xf @ params["w1"] + params["b1"], 0.0)
        h2 = jnp.maximum(h1 @ params["w2"] + params["b2"], 0.0)
        return h2 @ params["w3"] + params["b3"]

    # Case 1: small MNIST-like batch (B=2, NCHW) -> single grid step, partial block.
    x1 = jax.random.normal(k_x1, (2, 1, 28, 28), jnp.float32)
    logits1 = neural_network_forward(x1, prepared)
    jax.block_until_ready(logits1)
    assert logits1.shape == (2, OUT_FEATURES)
    xf1 = x1.reshape(2, -1)
    assert jnp.allclose(logits1, ref_bf16(xf1), atol=2e-3, rtol=2e-3)
    assert jnp.allclose(logits1, ref_f32(xf1), atol=5e-2, rtol=5e-2)

    # Case 2: B=30 -> balanced tiles (tb=16), 2 grid steps, clipped final block.
    x2 = jax.random.normal(k_x2, (30, 1, 28, 28), jnp.float32)
    logits2 = neural_network_forward(x2, prepared)
    jax.block_until_ready(logits2)
    assert logits2.shape == (30, OUT_FEATURES)
    xf2 = x2.reshape(30, -1)
    assert jnp.allclose(logits2, ref_bf16(xf2), atol=2e-3, rtol=2e-3)
    assert jnp.allclose(logits2, ref_f32(xf2), atol=5e-2, rtol=5e-2)

    print("KERNEL_OK")
</pallas_src>

<mosaic_0001>
module attributes {stable_mosaic.version = 11 : i64} {
  func.func @_mlp_kernel(%arg0: i32, %arg1: memref<8x784xf32, #tpu.memory_space<vmem>>, %arg2: memref<784x512xbf16, #tpu.memory_space<vmem>>, %arg3: memref<1x512xf32, #tpu.memory_space<vmem>>, %arg4: memref<512x512xbf16, #tpu.memory_space<vmem>>, %arg5: memref<1x512xf32, #tpu.memory_space<vmem>>, %arg6: memref<512x128xbf16, #tpu.memory_space<vmem>>, %arg7: memref<1x128xf32, #tpu.memory_space<vmem>>, %arg8: memref<8x128xf32, #tpu.memory_space<vmem>>) attributes {dimension_semantics = [#tpu.dimension_semantics<parallel>], iteration_bounds = array<i64: 1>, scalar_prefetch = 0 : i64, scratch_operands = 0 : i64, tpu.core_type = #tpu.core_type<tc>, window_params = [{transform_indices = @transform_0, window_bounds = array<i64: 8, 784>}, {pipeline_mode = #tpu.pipeline_mode<synchronous>, transform_indices = @transform_1, window_bounds = array<i64: 784, 512>}, {pipeline_mode = #tpu.pipeline_mode<synchronous>, transform_indices = @transform_2, window_bounds = array<i64: 1, 512>}, {pipeline_mode = #tpu.pipeline_mode<synchronous>, transform_indices = @transform_3, window_bounds = array<i64: 512, 512>}, {pipeline_mode = #tpu.pipeline_mode<synchronous>, transform_indices = @transform_4, window_bounds = array<i64: 1, 512>}, {pipeline_mode = #tpu.pipeline_mode<synchronous>, transform_indices = @transform_5, window_bounds = array<i64: 512, 128>}, {pipeline_mode = #tpu.pipeline_mode<synchronous>, transform_indices = @transform_6, window_bounds = array<i64: 1, 128>}, {transform_indices = @transform_7, window_bounds = array<i64: 8, 128>}]} {
    %c0 = arith.constant 0 : index
    %c0_0 = arith.constant 0 : index
    %0 = vector.load %arg1[%c0, %c0_0] : memref<8x784xf32, #tpu.memory_space<vmem>>, vector<8x784xf32>
    %1 = arith.truncf %0 : vector<8x784xf32> to vector<8x784xbf16>
    %c0_1 = arith.constant 0 : index
    %c0_2 = arith.constant 0 : index
    %2 = vector.load %arg2[%c0_1, %c0_2] : memref<784x512xbf16, #tpu.memory_space<vmem>>, vector<784x512xbf16>
    %cst = arith.constant dense<0.000000e+00> : vector<8x512xf32>
    %3 = tpu.matmul %1, %2, %cst {dimension_numbers = #tpu.dot_dimension_numbers<[1], [0], [0], [1], [0, 0, 1, 1], [], []>} : vector<8x784xbf16>, vector<784x512xbf16>, vector<8x512xf32> -> vector<8x512xf32>
    %c0_3 = arith.constant 0 : index
    %c0_4 = arith.constant 0 : index
    %4 = vector.load %arg3[%c0_3, %c0_4] : memref<1x512xf32, #tpu.memory_space<vmem>>, vector<1x512xf32>
    %5 = vector.broadcast %4 : vector<1x512xf32> to vector<8x512xf32>
    %6 = arith.addf %3, %5 : vector<8x512xf32>
    %cst_5 = arith.constant 0.000000e+00 : f32
    %7 = vector.broadcast %cst_5 : f32 to vector<8x512xf32>
    %8 = arith.maximumf %6, %7 : vector<8x512xf32>
    %9 = arith.truncf %8 : vector<8x512xf32> to vector<8x512xbf16>
    %c0_6 = arith.constant 0 : index
    %c0_7 = arith.constant 0 : index
    %10 = vector.load %arg4[%c0_6, %c0_7] : memref<512x512xbf16, #tpu.memory_space<vmem>>, vector<512x512xbf16>
    %cst_8 = arith.constant dense<0.000000e+00> : vector<8x512xf32>
    %11 = tpu.matmul %9, %10, %cst_8 {dimension_numbers = #tpu.dot_dimension_numbers<[1], [0], [0], [1], [0, 0, 1, 1], [], []>} : vector<8x512xbf16>, vector<512x512xbf16>, vector<8x512xf32> -> vector<8x512xf32>
    %c0_9 = arith.constant 0 : index
    %c0_10 = arith.constant 0 : index
    %12 = vector.load %arg5[%c0_9, %c0_10] : memref<1x512xf32, #tpu.memory_space<vmem>>, vector<1x512xf32>
    %13 = vector.broadcast %12 : vector<1x512xf32> to vector<8x512xf32>
    %14 = arith.addf %11, %13 : vector<8x512xf32>
    %cst_11 = arith.constant 0.000000e+00 : f32
    %15 = vector.broadcast %cst_11 : f32 to vector<8x512xf32>
    %16 = arith.maximumf %14, %15 : vector<8x512xf32>
    %17 = arith.truncf %16 : vector<8x512xf32> to vector<8x512xbf16>
    %c0_12 = arith.constant 0 : index
    %c0_13 = arith.constant 0 : index
    %18 = vector.load %arg6[%c0_12, %c0_13] : memref<512x128xbf16, #tpu.memory_space<vmem>>, vector<512x128xbf16>
    %cst_14 = arith.constant dense<0.000000e+00> : vector<8x128xf32>
    %19 = tpu.matmul %17, %18, %cst_14 {dimension_numbers = #tpu.dot_dimension_numbers<[1], [0], [0], [1], [0, 0, 1, 1], [], []>} : vector<8x512xbf16>, vector<512x128xbf16>, vector<8x128xf32> -> vector<8x128xf32>
    %c0_15 = arith.constant 0 : index
    %c0_16 = arith.constant 0 : index
    %20 = vector.load %arg7[%c0_15, %c0_16] : memref<1x128xf32, #tpu.memory_space<vmem>>, vector<1x128xf32>
    %21 = vector.broadcast %20 : vector<1x128xf32> to vector<8x128xf32>
    %22 = arith.addf %19, %21 : vector<8x128xf32>
    %c0_17 = arith.constant 0 : index
    %c0_18 = arith.constant 0 : index
    %23 = vector.load %arg8[%c0_17, %c0_18] : memref<8x128xf32, #tpu.memory_space<vmem>>, vector<8x128xf32>
    tpu.vector_store %arg8[%c0_17, %c0_18], %22 {strides = array<i32>} : memref<8x128xf32, #tpu.memory_space<vmem>>, vector<8x128xf32>,
    return
  }
  func.func @transform_0(%arg0: i32) -> (i32, i32) {
    %c0_i32 = arith.constant 0 : i32
    %c0_i32_0 = arith.constant 0 : i32
    return %arg0, %c0_i32 : i32, i32
  }
  func.func @transform_1(%arg0: i32) -> (i32, i32) {
    %c0_i32 = arith.constant 0 : i32
    %c0_i32_0 = arith.constant 0 : i32
    %c0_i32_1 = arith.constant 0 : i32
    return %c0_i32, %c0_i32_0 : i32, i32
  }
  func.func @transform_2(%arg0: i32) -> (i32, i32) {
    %c0_i32 = arith.constant 0 : i32
    %c0_i32_0 = arith.constant 0 : i32
    %c0_i32_1 = arith.constant 0 : i32
    return %c0_i32, %c0_i32_0 : i32, i32
  }
  func.func @transform_3(%arg0: i32) -> (i32, i32) {
    %c0_i32 = arith.constant 0 : i32
    %c0_i32_0 = arith.constant 0 : i32
    %c0_i32_1 = arith.constant 0 : i32
    return %c0_i32, %c0_i32_0 : i32, i32
  }
  func.func @transform_4(%arg0: i32) -> (i32, i32) {
    %c0_i32 = arith.constant 0 : i32
    %c0_i32_0 = arith.constant 0 : i32
    %c0_i32_1 = arith.constant 0 : i32
    return %c0_i32, %c0_i32_0 : i32, i32
  }
  func.func @transform_5(%arg0: i32) -> (i32, i32) {
    %c0_i32 = arith.constant 0 : i32
    %c0_i32_0 = arith.constant 0 : i32
    %c0_i32_1 = arith.constant 0 : i32
    return %c0_i32, %c0_i32_0 : i32, i32
  }
  func.func @transform_6(%arg0: i32) -> (i32, i32) {
    %c0_i32 = arith.constant 0 : i32
    %c0_i32_0 = arith.constant 0 : i32
    %c0_i32_1 = arith.constant 0 : i32
    return %c0_i32, %c0_i32_0 : i32, i32
  }
  func.func @transform_7(%arg0: i32) -> (i32, i32) {
    %c0_i32 = arith.constant 0 : i32
    %c0_i32_0 = arith.constant 0 : i32
    return %arg0, %c0_i32 : i32, i32
  }
}

</mosaic_0001>

<llo_original>
// kernel: neural_network_forward.1
$region0: #{neural_network_forward.1}
  #allocation0 [shape = 'u32[]', space=smem, size = 0x4, offset = 0x4, fixed_abs, tag = 'smem constant byte address 0x4 - core index']
  #allocation1 [shape = 'u32[144,128]{1,0:T(1,128)}', space=vmem, size = 0x12000, scoped, tag = 'internal scratch']
  %s0 = inlined_call_operand.vmem [shape: f32[2,784], index: 0, kind: input, shape index: {}]
  %s1 = inlined_call_operand.hbm [shape: bf16[784,512], index: 1, kind: input, shape index: {}]
  %s2 = inlined_call_operand.vmem [shape: f32[1,512], index: 2, kind: input, shape index: {}]
  %s3 = inlined_call_operand.hbm [shape: bf16[512,512], index: 3, kind: input, shape index: {}]
  %s4 = inlined_call_operand.vmem [shape: f32[1,512], index: 4, kind: input, shape index: {}]
  %s5 = inlined_call_operand.hbm [shape: bf16[512,128], index: 5, kind: input, shape index: {}]
  %s6 = inlined_call_operand.vmem [shape: f32[1,128], index: 6, kind: input, shape index: {}]
  %s7 = inlined_call_operand.hbm [shape: f32[2,128], index: 7, kind: output, shape index: {}]
  %s8 = sld [smem:[#allocation0]]
  $region50: #{neural_network_forward.1} parent=0
    _
  %s10 = ssub.s32 1, %s8
  %s11 = scalar_select 0, %s10, %s8
  $region1: #{neural_network_forward.1} parent=0
    #allocation2 [shape = 'u8[802816]{0}', space=vmem, size = 0xc4000, scoped, tag = 'input window, operand 1, single buffered']
    #allocation3 [shape = 's32[1]{0}', space=sflag, size = 0x4, scoped, tag = 'scoped memory for neural_network_forward.1']
    #allocation4 [shape = 's32[1]{0}', space=sflag, size = 0x4, scoped, tag = 'scoped memory for neural_network_forward.1']
    #allocation5 [shape = 'u8[524288]{0}', space=vmem, size = 0x80000, scoped, tag = 'input window, operand 3, single buffered']
    #allocation6 [shape = 's32[1]{0}', space=sflag, size = 0x4, scoped, tag = 'scoped memory for neural_network_forward.1']
    #allocation7 [shape = 'u8[131072]{0}', space=vmem, size = 0x20000, scoped, tag = 'input window, operand 5, single buffered']
    #allocation8 [shape = 'u8[4096]{0}', space=vmem, size = 0x1000, scoped, tag = 'output window, operand 0, single buffered']
    %12 = vsyncpa [#allocation3], 0
    %13 = vsyncpa [#allocation6], 0
    %14 = vsyncpa [#allocation4], 0
    // Predicated region
    $region2: #{neural_network_forward.1} parent=1 // pred_check
      _
    $region3: #{neural_network_forward.1} parent=1 // pred_check_branch
      %16 = sbr.rel (0) target = $region5
    $region4: #{neural_network_forward.1} parent=1 // pred_region
      _
    $region5: #{neural_network_forward.1} parent=1 // pred_fallthru
      _
    // Predicated region
    $region6: #{neural_network_forward.1} parent=1 // pred_check
      _
    $region7: #{neural_network_forward.1} parent=1 // pred_check_branch
      %18 = sbr.rel (0) target = $region9
    $region8: #{neural_network_forward.1} parent=1 // pred_region
      %s20 = ssub.s32 25088, 25088
      %21 = vsyncadd [#allocation3], %s20
      %s22 = sshll.u32 [#allocation2], 4
      %s23 = int_to_ptr.vmem [resolvable:$true] %s22
      %28 = dma.hbm_to_vmem [thread:$0]  %s1, 25088, %s23, [#allocation3], 256, 256, 16
    $region9: #{neural_network_forward.1} parent=1 // pred_fallthru
      _
    // Predicated region
    $region10: #{neural_network_forward.1} parent=1 // pred_check
      _
    $region11: #{neural_network_forward.1} parent=1 // pred_check_branch
      %30 = sbr.rel (0) target = $region13
    $region12: #{neural_network_forward.1} parent=1 // pred_region
      _
    $region13: #{neural_network_forward.1} parent=1 // pred_fallthru
      _
    // Predicated region
    $region14: #{neural_network_forward.1} parent=1 // pred_check
      _
    $region15: #{neural_network_forward.1} parent=1 // pred_check_branch
      %32 = sbr.rel (0) target = $region17
    $region16: #{neural_network_forward.1} parent=1 // pred_region
      %s34 = ssub.s32 16384, 16384
      %35 = vsyncadd [#allocation6], %s34
      %s36 = sshll.u32 [#allocation5], 4
      %s37 = int_to_ptr.vmem [resolvable:$true] %s36
      %42 = dma.hbm_to_vmem [thread:$0]  %s3, 16384, %s37, [#allocation6], 256, 256, 16
    $region17: #{neural_network_forward.1} parent=1 // pred_fallthru
      _
    // Predicated region
    $region18: #{neural_network_forward.1} parent=1 // pred_check
      _
    $region19: #{neural_network_forward.1} parent=1 // pred_check_branch
      %44 = sbr.rel (0) target = $region21
    $region20: #{neural_network_forward.1} parent=1 // pred_region
      _
    $region21: #{neural_network_forward.1} parent=1 // pred_fallthru
      _
    // Predicated region
    $region22: #{neural_network_forward.1} parent=1 // pred_check
      _
    $region23: #{neural_network_forward.1} parent=1 // pred_check_branch
      %46 = sbr.rel (0) target = $region25
    $region24: #{neural_network_forward.1} parent=1 // pred_region
      %s48 = ssub.s32 4096, 4096
      %49 = vsyncadd [#allocation6], %s48
      %s50 = sshll.u32 [#allocation7], 4
      %s51 = int_to_ptr.vmem [resolvable:$true] %s50
      %56 = dma.hbm_to_vmem [thread:$0]  %s5, 4096, %s51, [#allocation6], 64, 64, 4
    $region25: #{neural_network_forward.1} parent=1 // pred_fallthru
      _
    // Predicated region
    $region26: #{neural_network_forward.1} parent=1 // pred_check
      _
    $region27: #{neural_network_forward.1} parent=1 // pred_check_branch
      %58 = sbr.rel (0) target = $region29
    $region28: #{neural_network_forward.1} parent=1 // pred_region
      _
    $region29: #{neural_network_forward.1} parent=1 // pred_fallthru
      _
    // Predicated region
    $region30: #{neural_network_forward.1} parent=1 // pred_check
      _
    $region31: #{neural_network_forward.1} parent=1 // pred_check_branch
      %60 = sbr.rel (0) target = $region33
    $region32: #{neural_network_forward.1} parent=1 // pred_region
      %61 = dma.done [#allocation3], 25088
    $region33: #{neural_network_forward.1} parent=1 // pred_fallthru
      _
    // Predicated region
    $region34: #{neural_network_forward.1} parent=1 // pred_check
      _
    $region35: #{neural_network_forward.1} parent=1 // pred_check_branch
      %63 = sbr.rel (0) target = $region37
    $region36: #{neural_network_forward.1} parent=1 // pred_region
      %64 = dma.done [#allocation6], 16384
    $region37: #{neural_network_forward.1} parent=1 // pred_fallthru
      _
    // Predicated region
    $region38: #{neural_network_forward.1} parent=1 // pred_check
      _
    $region39: #{neural_network_forward.1} parent=1 // pred_check_branch
      %66 = sbr.rel (0) target = $region41
    $region40: #{neural_network_forward.1} parent=1 // pred_region
      %67 = dma.done [#allocation6], 4096
    $region41: #{neural_network_forward.1} parent=1 // pred_fallthru
      _
    %v69 = vld [vmem:[%s0] sm:$0xff]
    %v70 = vld [vmem:[%s0 + $0x8] sm:$0x3f]
    %v71 = vld [vmem:[%s0 + $0xe] sm:$0xff]
    %v72 = vld [vmem:[%s0 + $0x16] sm:$0x3f]
    %v73 = vld [vmem:[%s0 + $0x1c] sm:$0xff]
    %v74 = vld [vmem:[%s0 + $0x24] sm:$0x3f]
    %v75 = vld [vmem:[%s0 + $0x2a] sm:$0xff]
    %v76 = vld [vmem:[%s0 + $0x32] sm:$0x3f]
    %v85 = vcombine.low %v69, %v71
    %v86 = vcombine.high %v69, %v71
    %v87 = vcombine.low %v73, %v75
    %v88 = vcombine.high %v73, %v75
    %v90 = vunpack.c.l.s4 1983009808
    %v91 = vunpack.c.0.s8 %v90
    %v92 = vlaneseq
    %v93 = vshrl.u32 %v92, 7
    %v94 = vsub.s32 %v91, %v93
    %v95 = vrot.slane %v85, %v94
    %v97 = vunpack.c.l.s4 1983009808
    %v98 = vunpack.c.0.s8 %v97
    %v99 = vlaneseq
    %v100 = vshrl.u32 %v99, 7
    %v101 = vsub.s32 %v98, %v100
    %v102 = vrot.slane %v86, %v101
    %v104 = vunpack.c.l.s4 1983009808
    %v105 = vunpack.c.0.s8 %v104
    %v106 = vlaneseq
    %v107 = vshrl.u32 %v106, 7
    %v108 = vsub.s32 %v105, %v107
    %v109 = vrot.slane %v87, %v108
    %v111 = vunpack.c.l.s4 1983009808
    %v112 = vunpack.c.0.s8 %v111
    %v113 = vlaneseq
    %v114 = vshrl.u32 %v113, 7
    %v115 = vsub.s32 %v112, %v114
    %v116 = vrot.slane %v88, %v115
    %v117 = vcombine.low %v95, %v109
    %v118 = vcombine.high %v95, %v109
    %v119 = vcombine.low %v102, %v116
    %v120 = vcombine.high %v102, %v116
    %v121 = vcombine.low %v70, %v72
    %v122 = vcombine.high %v70, %v72
    %v123 = vcombine.low %v74, %v76
    %v124 = vcombine.high %v74, %v76
    %v126 = vunpack.c.l.s4 1983009808
    %v127 = vunpack.c.0.s8 %v126
    %v128 = vlaneseq
    %v129 = vshrl.u32 %v128, 7
    %v130 = vsub.s32 %v127, %v129
    %v131 = vrot.slane %v121, %v130
    %v133 = vunpack.c.l.s4 1983009808
    %v134 = vunpack.c.0.s8 %v133
    %v135 = vlaneseq
    %v136 = vshrl.u32 %v135, 7
    %v137 = vsub.s32 %v134, %v136
    %v138 = vrot.slane %v122, %v137
    %v140 = vunpack.c.l.s4 1983009808
    %v141 = vunpack.c.0.s8 %v140
    %v142 = vlaneseq
    %v143 = vshrl.u32 %v142, 7
    %v144 = vsub.s32 %v141, %v143
    %v145 = vrot.slane %v123, %v144
    %v147 = vunpack.c.l.s4 1983009808
    %v148 = vunpack.c.0.s8 %v147
    %v149 = vlaneseq
    %v150 = vshrl.u32 %v149, 7
    %v151 = vsub.s32 %v148, %v150
    %v152 = vrot.slane %v124, %v151
    %v153 = vcombine.low %v131, %v145
    %v154 = vcombine.high %v131, %v145
    %v155 = vcombine.low %v138, %v152
    %v163 = vpack.c.bf16 %v117, %v117
    %v164 = vpack.c.bf16 %v118, %v118
    %v165 = vpack.c.bf16 %v119, %v119
    %v166 = vpack.c.bf16 %v120, %v120
    %v167 = vpack.c.bf16 %v153, %v153
    %v168 = vpack.c.bf16 %v154, %v154
    %v169 = vpack.c.bf16 %v155, %v155
    %v170 = vld [vmem:[#allocation2] sm:$0xff]
    %v171 = vld [vmem:[#allocation2 + $0x8] sm:$0xff]
    %v172 = vld [vmem:[#allocation2 + $0x10] sm:$0xff]
    %v173 = vld [vmem:[#allocation2 + $0x18] sm:$0xff]
    %v174 = vld [vmem:[#allocation2 + $0x20] sm:$0xff]
    %v175 = vld [vmem:[#allocation2 + $0x28] sm:$0xff]
    %v176 = vld [vmem:[#allocation2 + $0x30] sm:$0xff]
    %v177 = vld [vmem:[#allocation2 + $0x38] sm:$0xff]
    %v178 = vld [vmem:[#allocation2 + $0x40] sm:$0xff]
    %v179 = vld [vmem:[#allocation2 + $0x48] sm:$0xff]
    %v180 = vld [vmem:[#allocation2 + $0x50] sm:$0xff]
    %v181 = vld [vmem:[#allocation2 + $0x58] sm:$0xff]
    %v182 = vld [vmem:[#allocation2 + $0x60] sm:$0xff]
    %v183 = vld [vmem:[#allocation2 + $0x68] sm:$0xff]
    %v184 = vld [vmem:[#allocation2 + $0x70] sm:$0xff]
    %v185 = vld [vmem:[#allocation2 + $0x78] sm:$0xff]
    %v186 = vld [vmem:[#allocation2 + $0x80] sm:$0xff]
    %v187 = vld [vmem:[#allocation2 + $0x88] sm:$0xff]
    %v188 = vld [vmem:[#allocation2 + $0x90] sm:$0xff]
    %v189 = vld [vmem:[#allocation2 + $0x98] sm:$0xff]
    %v190 = vld [vmem:[#allocation2 + $0xa0] sm:$0xff]
    %v191 = vld [vmem:[#allocation2 + $0xa8] sm:$0xff]
    %v192 = vld [vmem:[#allocation2 + $0xb0] sm:$0xff]
    %v193 = vld [vmem:[#allocation2 + $0xb8] sm:$0xff]
    %v194 = vld [vmem:[#allocation2 + $0xc0] sm:$0xff]
    %v195 = vld [vmem:[#allocation2 + $0xc8] sm:$0xff]
    %v196 = vld [vmem:[#allocation2 + $0xd0] sm:$0xff]
    %v197 = vld [vmem:[#allocation2 + $0xd8] sm:$0xff]
    %v198 = vld [vmem:[#allocation2 + $0xe0] sm:$0xff]
    %v199 = vld [vmem:[#allocation2 + $0xe8] sm:$0xff]
    %v200 = vld [vmem:[#allocation2 + $0xf0] sm:$0xff]
    %v201 = vld [vmem:[#allocation2 + $0xf8] sm:$0xff]
    %v202 = vld [vmem:[#allocation2 + $0x100] sm:$0xff]
    %v203 = vld [vmem:[#allocation2 + $0x108] sm:$0xff]
    %v204 = vld [vmem:[#allocation2 + $0x110] sm:$0xff]
    %v205 = vld [vmem:[#allocation2 + $0x118] sm:$0xff]
    %v206 = vld [vmem:[#allocation2 + $0x120] sm:$0xff]
    %v207 = vld [vmem:[#allocation2 + $0x128] sm:$0xff]
    %v208 = vld [vmem:[#allocation2 + $0x130] sm:$0xff]
    %v209 = vld [vmem:[#allocation2 + $0x138] sm:$0xff]
    %v210 = vld [vmem:[#allocation2 + $0x140] sm:$0xff]
    %v211 = vld [vmem:[#allocation2 + $0x148] sm:$0xff]
    %v212 = vld [vmem:[#allocation2 + $0x150] sm:$0xff]
    %v213 = vld [vmem:[#allocation2 + $0x158] sm:$0xff]
    %v214 = vld [vmem:[#allocation2 + $0x160] sm:$0xff]
    %v215 = vld [vmem:[#allocation2 + $0x168] sm:$0xff]
    %v216 = vld [vmem:[#allocation2 + $0x170] sm:$0xff]
    %v217 = vld [vmem:[#allocation2 + $0x178] sm:$0xff]
    %v218 = vld [vmem:[#allocation2 + $0x180] sm:$0xff]
    %v219 = vld [vmem:[#allocation2 + $0x188] sm:$0xff]
    %v220 = vld [vmem:[#allocation2 + $0x190] sm:$0xff]
    %v221 = vld [vmem:[#allocation2 + $0x198] sm:$0xff]
    %v222 = vld [vmem:[#allocation2 + $0x1a0] sm:$0xff]
    %v223 = vld [vmem:[#allocation2 + $0x1a8] sm:$0xff]
    %v224 = vld [vmem:[#allocation2 + $0x1b0] sm:$0xff]
    %v225 = vld [vmem:[#allocation2 + $0x1b8] sm:$0xff]
    %v226 = vld [vmem:[#allocation2 + $0x1c0] sm:$0xff]
    %v227 = vld [vmem:[#allocation2 + $0x1c8] sm:$0xff]
    %v228 = vld [vmem:[#allocation2 + $0x1d0] sm:$0xff]
    %v229 = vld [vmem:[#allocation2 + $0x1d8] sm:$0xff]
    %v230 = vld [vmem:[#allocation2 + $0x1e0] sm:$0xff]
    %v231 = vld [vmem:[#allocation2 + $0x1e8] sm:$0xff]
    %v232 = vld [vmem:[#allocation2 + $0x1f0] sm:$0xff]
    %v233 = vld [vmem:[#allocation2 + $0x1f8] sm:$0xff]
    %v234 = vld [vmem:[#allocation2 + $0x200] sm:$0xff]
    %v235 = vld [vmem:[#allocation2 + $0x208] sm:$0xff]
    %v236 = vld [vmem:[#allocation2 + $0x210] sm:$0xff]
    %v237 = vld [vmem:[#allocation2 + $0x218] sm:$0xff]
    %v238 = vld [vmem:[#allocation2 + $0x220] sm:$0xff]
    %v239 = vld [vmem:[#allocation2 + $0x228] sm:$0xff]
    %v240 = vld [vmem:[#allocation2 + $0x230] sm:$0xff]
    %v241 = vld [vmem:[#allocation2 + $0x238] sm:$0xff]
    %v242 = vld [vmem:[#allocation2 + $0x240] sm:$0xff]
    %v243 = vld [vmem:[#allocation2 + $0x248] sm:$0xff]
    %v244 = vld [vmem:[#allocation2 + $0x250] sm:$0xff]
    %v245 = vld [vmem:[#allocation2 + $0x258] sm:$0xff]
    %v246 = vld [vmem:[#allocation2 + $0x260] sm:$0xff]
    %v247 = vld [vmem:[#allocation2 + $0x268] sm:$0xff]
    %v248 = vld [vmem:[#allocation2 + $0x270] sm:$0xff]
    %v249 = vld [vmem:[#allocation2 + $0x278] sm:$0xff]
    %v250 = vld [vmem:[#allocation2 + $0x280] sm:$0xff]
    %v251 = vld [vmem:[#allocation2 + $0x288] sm:$0xff]
    %v252 = vld [vmem:[#allocation2 + $0x290] sm:$0xff]
    %v253 = vld [vmem:[#allocation2 + $0x298] sm:$0xff]
    %v254 = vld [vmem:[#allocation2 + $0x2a0] sm:$0xff]
    %v255 = vld [vmem:[#allocation2 + $0x2a8] sm:$0xff]
    %v256 = vld [vmem:[#allocation2 + $0x2b0] sm:$0xff]
    %v257 = vld [vmem:[#allocation2 + $0x2b8] sm:$0xff]
    %v258 = vld [vmem:[#allocation2 + $0x2c0] sm:$0xff]
    %v259 = vld [vmem:[#allocation2 + $0x2c8] sm:$0xff]
    %v260 = vld [vmem:[#allocation2 + $0x2d0] sm:$0xff]
    %v261 = vld [vmem:[#allocation2 + $0x2d8] sm:$0xff]
    %v262 = vld [vmem:[#allocation2 + $0x2e0] sm:$0xff]
    %v263 = vld [vmem:[#allocation2 + $0x2e8] sm:$0xff]
    %v264 = vld [vmem:[#allocation2 + $0x2f0] sm:$0xff]
    %v265 = vld [vmem:[#allocation2 + $0x2f8] sm:$0xff]
    %v266 = vld [vmem:[#allocation2 + $0x300] sm:$0xff]
    %v267 = vld [vmem:[#allocation2 + $0x308] sm:$0xff]
    %v268 = vld [vmem:[#allocation2 + $0x310] sm:$0xff]
    %v269 = vld [vmem:[#allocation2 + $0x318] sm:$0xff]
    %v270 = vld [vmem:[#allocation2 + $0x320] sm:$0xff]
    %v271 = vld [vmem:[#allocation2 + $0x328] sm:$0xff]
    %v272 = vld [vmem:[#allocation2 + $0x330] sm:$0xff]
    %v273 = vld [vmem:[#allocation2 + $0x338] sm:$0xff]
    %v274 = vld [vmem:[#allocation2 + $0x340] sm:$0xff]
    %v275 = vld [vmem:[#allocation2 + $0x348] sm:$0xff]
    %v276 = vld [vmem:[#allocation2 + $0x350] sm:$0xff]
    %v277 = vld [vmem:[#allocation2 + $0x358] sm:$0xff]
    %v278 = vld [vmem:[#allocation2 + $0x360] sm:$0xff]
    %v279 = vld [vmem:[#allocation2 + $0x368] sm:$0xff]
    %v280 = vld [vmem:[#allocation2 + $0x370] sm:$0xff]
    %v281 = vld [vmem:[#allocation2 + $0x378] sm:$0xff]
    %v282 = vld [vmem:[#allocation2 + $0x380] sm:$0xff]
    %v283 = vld [vmem:[#allocation2 + $0x388] sm:$0xff]
    %v284 = vld [vmem:[#allocation2 + $0x390] sm:$0xff]
    %v285 = vld [vmem:[#allocation2 + $0x398] sm:$0xff]
    %v286 = vld [vmem:[#allocation2 + $0x3a0] sm:$0xff]
    %v287 = vld [vmem:[#allocation2 + $0x3a8] sm:$0xff]
    %v288 = vld [vmem:[#allocation2 + $0x3b0] sm:$0xff]
    %v289 = vld [vmem:[#allocation2 + $0x3b8] sm:$0xff]
    %v290 = vld [vmem:[#allocation2 + $0x3c0] sm:$0xff]
    %v291 = vld [vmem:[#allocation2 + $0x3c8] sm:$0xff]
    %v292 = vld [vmem:[#allocation2 + $0x3d0] sm:$0xff]
    %v293 = vld [vmem:[#allocation2 + $0x3d8] sm:$0xff]
    %v294 = vld [vmem:[#allocation2 + $0x3e0] sm:$0xff]
    %v295 = vld [vmem:[#allocation2 + $0x3e8] sm:$0xff]
    %v296 = vld [vmem:[#allocation2 + $0x3f0] sm:$0xff]
    %v297 = vld [vmem:[#allocation2 + $0x3f8] sm:$0xff]
    %v298 = vld [vmem:[#allocation2 + $0x400] sm:$0xff]
    %v299 = vld [vmem:[#allocation2 + $0x408] sm:$0xff]
    %v300 = vld [vmem:[#allocation2 + $0x410] sm:$0xff]
    %v301 = vld [vmem:[#allocation2 + $0x418] sm:$0xff]
    %v302 = vld [vmem:[#allocation2 + $0x420] sm:$0xff]
    %v303 = vld [vmem:[#allocation2 + $0x428] sm:$0xff]
    %v304 = vld [vmem:[#allocation2 + $0x430] sm:$0xff]
    %v305 = vld [vmem:[#allocation2 + $0x438] sm:$0xff]
    %v306 = vld [vmem:[#allocation2 + $0x440] sm:$0xff]
    %v307 = vld [vmem:[#allocation2 + $0x448] sm:$0xff]
    %v308 = vld [vmem:[#allocation2 + $0x450] sm:$0xff]
    %v309 = vld [vmem:[#allocation2 + $0x458] sm:$0xff]
    %v310 = vld [vmem:[#allocation2 + $0x460] sm:$0xff]
    %v311 = vld [vmem:[#allocation2 + $0x468] sm:$0xff]
    %v312 = vld [vmem:[#allocation2 + $0x470] sm:$0xff]
    %v313 = vld [vmem:[#allocation2 + $0x478] sm:$0xff]
    %v314 = vld [vmem:[#allocation2 + $0x480] sm:$0xff]
    %v315 = vld [vmem:[#allocation2 + $0x488] sm:$0xff]
    %v316 = vld [vmem:[#allocation2 + $0x490] sm:$0xff]
    %v317 = vld [vmem:[#allocation2 + $0x498] sm:$0xff]
    %v318 = vld [vmem:[#allocation2 + $0x4a0] sm:$0xff]
    %v319 = vld [vmem:[#allocation2 + $0x4a8] sm:$0xff]
    %v320 = vld [vmem:[#allocation2 + $0x4b0] sm:$0xff]
    %v321 = vld [vmem:[#allocation2 + $0x4b8] sm:$0xff]
    %v322 = vld [vmem:[#allocation2 + $0x4c0] sm:$0xff]
    %v323 = vld [vmem:[#allocation2 + $0x4c8] sm:$0xff]
    %v324 = vld [vmem:[#allocation2 + $0x4d0] sm:$0xff]
    %v325 = vld [vmem:[#allocation2 + $0x4d8] sm:$0xff]
    %v326 = vld [vmem:[#allocation2 + $0x4e0] sm:$0xff]
    %v327 = vld [vmem:[#allocation2 + $0x4e8] sm:$0xff]
    %v328 = vld [vmem:[#allocation2 + $0x4f0] sm:$0xff]
    %v329 = vld [vmem:[#allocation2 + $0x4f8] sm:$0xff]
    %v330 = vld [vmem:[#allocation2 + $0x500] sm:$0xff]
    %v331 = vld [vmem:[#allocation2 + $0x508] sm:$0xff]
    %v332 = vld [vmem:[#allocation2 + $0x510] sm:$0xff]
    %v333 = vld [vmem:[#allocation2 + $0x518] sm:$0xff]
    %v334 = vld [vmem:[#allocation2 + $0x520] sm:$0xff]
    %v335 = vld [vmem:[#allocation2 + $0x528] sm:$0xff]
    %v336 = vld [vmem:[#allocation2 + $0x530] sm:$0xff]
    %v337 = vld [vmem:[#allocation2 + $0x538] sm:$0xff]
    %v338 = vld [vmem:[#allocation2 + $0x540] sm:$0xff]
    %v339 = vld [vmem:[#allocation2 + $0x548] sm:$0xff]
    %v340 = vld [vmem:[#allocation2 + $0x550] sm:$0xff]
    %v341 = vld [vmem:[#allocation2 + $0x558] sm:$0xff]
    %v342 = vld [vmem:[#allocation2 + $0x560] sm:$0xff]
    %v343 = vld [vmem:[#allocation2 + $0x568] sm:$0xff]
    %v344 = vld [vmem:[#allocation2 + $0x570] sm:$0xff]
    %v345 = vld [vmem:[#allocation2 + $0x578] sm:$0xff]
    %v346 = vld [vmem:[#allocation2 + $0x580] sm:$0xff]
    %v347 = vld [vmem:[#allocation2 + $0x588] sm:$0xff]
    %v348 = vld [vmem:[#allocation2 + $0x590] sm:$0xff]
    %v349 = vld [vmem:[#allocation2 + $0x598] sm:$0xff]
    %v350 = vld [vmem:[#allocation2 + $0x5a0] sm:$0xff]
    %v351 = vld [vmem:[#allocation2 + $0x5a8] sm:$0xff]
    %v352 = vld [vmem:[#allocation2 + $0x5b0] sm:$0xff]
    %v353 = vld [vmem:[#allocation2 + $0x5b8] sm:$0xff]
    %v354 = vld [vmem:[#allocation2 + $0x5c0] sm:$0xff]
    %v355 = vld [vmem:[#allocation2 + $0x5c8] sm:$0xff]
    %v356 = vld [vmem:[#allocation2 + $0x5d0] sm:$0xff]
    %v357 = vld [vmem:[#allocation2 + $0x5d8] sm:$0xff]
    %v358 = vld [vmem:[#allocation2 + $0x5e0] sm:$0xff]
    %v359 = vld [vmem:[#allocation2 + $0x5e8] sm:$0xff]
    %v360 = vld [vmem:[#allocation2 + $0x5f0] sm:$0xff]
    %v361 = vld [vmem:[#allocation2 + $0x5f8] sm:$0xff]
    %v362 = vld [vmem:[#allocation2 + $0x600] sm:$0xff]
    %v363 = vld [vmem:[#allocation2 + $0x608] sm:$0xff]
    %v364 = vld [vmem:[#allocation2 + $0x610] sm:$0xff]
    %v365 = vld [vmem:[#allocation2 + $0x618] sm:$0xff]
    %v366 = vld [vmem:[%s2] sm:$0xf]
    %v368 = vlaneseq
    %v369 = vshrl.u32 %v368, 7
    %v370 = vsub.s32 0, %v369
    %v371 = vrot.slane %v366, %v370
    %v372 = vlaneseq
    %v373 = vshrl.u32 %v372, 7
    %v374 = vsub.s32 1, %v373
    %v375 = vrot.slane %v366, %v374
    %v376 = vlaneseq
    %v377 = vshrl.u32 %v376, 7
    %v378 = vsub.s32 2, %v377
    %v379 = vrot.slane %v366, %v378
    %v380 = vlaneseq
    %v381 = vshrl.u32 %v380, 7
    %v382 = vsub.s32 3, %v381
    %v383 = vrot.slane %v366, %v382
    %v584 = vunpack.c.l.b16 %v170
    %v585 = vunpack.c.h.b16 %v170
    %v586 = vunpack.c.l.b16 %v171
    %v587 = vunpack.c.h.b16 %v171
    %v588 = vunpack.c.l.b16 %v172
    %v589 = vunpack.c.h.b16 %v172
    %v590 = vunpack.c.l.b16 %v173
    %v591 = vunpack.c.h.b16 %v173
    %v592 = vunpack.c.l.b16 %v174
    %v593 = vunpack.c.h.b16 %v174
    %v594 = vunpack.c.l.b16 %v175
    %v595 = vunpack.c.h.b16 %v175
    %v596 = vunpack.c.l.b16 %v176
    %v597 = vunpack.c.h.b16 %v176
    %v598 = vunpack.c.l.b16 %v177
    %v599 = vunpack.c.h.b16 %v177
    %v600 = vunpack.c.l.b16 %v178
    %v601 = vunpack.c.h.b16 %v178
    %v602 = vunpack.c.l.b16 %v179
    %v603 = vunpack.c.h.b16 %v179
    %v604 = vunpack.c.l.b16 %v180
    %v605 = vunpack.c.h.b16 %v180
    %v606 = vunpack.c.l.b16 %v181
    %v607 = vunpack.c.h.b16 %v181
    %v608 = vunpack.c.l.b16 %v182
    %v609 = vunpack.c.h.b16 %v182
    %v610 = vunpack.c.l.b16 %v183
    %v611 = vunpack.c.h.b16 %v183
    %v612 = vunpack.c.l.b16 %v184
    %v613 = vunpack.c.h.b16 %v184
    %v614 = vunpack.c.l.b16 %v185
    %v615 = vunpack.c.h.b16 %v185
    %v616 = vunpack.c.l.b16 %v186
    %v617 = vunpack.c.h.b16 %v186
    %v618 = vunpack.c.l.b16 %v187
    %v619 = vunpack.c.h.b16 %v187
    %v620 = vunpack.c.l.b16 %v188
    %v621 = vunpack.c.h.b16 %v188
    %v622 = vunpack.c.l.b16 %v189
    %v623 = vunpack.c.h.b16 %v189
    %v624 = vunpack.c.l.b16 %v190
    %v625 = vunpack.c.h.b16 %v190
    %v626 = vunpack.c.l.b16 %v191
    %v627 = vunpack.c.h.b16 %v191
    %v628 = vunpack.c.l.b16 %v192
    %v629 = vunpack.c.h.b16 %v192
    %v630 = vunpack.c.l.b16 %v193
    %v631 = vunpack.c.h.b16 %v193
    %v632 = vunpack.c.l.b16 %v194
    %v633 = vunpack.c.h.b16 %v194
    %v634 = vunpack.c.l.b16 %v195
    %v635 = vunpack.c.h.b16 %v195
    %v636 = vunpack.c.l.b16 %v196
    %v637 = vunpack.c.h.b16 %v196
    %v638 = vunpack.c.l.b16 %v197
    %v639 = vunpack.c.h.b16 %v197
    %v640 = vunpack.c.l.b16 %v198
    %v641 = vunpack.c.h.b16 %v198
    %v642 = vunpack.c.l.b16 %v199
    %v643 = vunpack.c.h.b16 %v199
    %v644 = vunpack.c.l.b16 %v200
    %v645 = vunpack.c.h.b16 %v200
    %v646 = vunpack.c.l.b16 %v201
    %v647 = vunpack.c.h.b16 %v201
    %v648 = vunpack.c.l.b16 %v202
    %v649 = vunpack.c.h.b16 %v202
    %v650 = vunpack.c.l.b16 %v203
    %v651 = vunpack.c.h.b16 %v203
    %v652 = vunpack.c.l.b16 %v204
    %v653 = vunpack.c.h.b16 %v204
    %v654 = vunpack.c.l.b16 %v205
    %v655 = vunpack.c.h.b16 %v205
    %v656 = vunpack.c.l.b16 %v206
    %v657 = vunpack.c.h.b16 %v206
    %v658 = vunpack.c.l.b16 %v207
    %v659 = vunpack.c.h.b16 %v207
    %v660 = vunpack.c.l.b16 %v208
    %v661 = vunpack.c.h.b16 %v208
    %v662 = vunpack.c.l.b16 %v209
    %v663 = vunpack.c.h.b16 %v209
    %v664 = vunpack.c.l.b16 %v210
    %v665 = vunpack.c.h.b16 %v210
    %v666 = vunpack.c.l.b16 %v211
    %v667 = vunpack.c.h.b16 %v211
    %v668 = vunpack.c.l.b16 %v212
    %v669 = vunpack.c.h.b16 %v212
    %v670 = vunpack.c.l.b16 %v213
    %v671 = vunpack.c.h.b16 %v213
    %v672 = vunpack.c.l.b16 %v214
    %v673 = vunpack.c.h.b16 %v214
    %v674 = vunpack.c.l.b16 %v215
    %v675 = vunpack.c.h.b16 %v215
    %v676 = vunpack.c.l.b16 %v216
    %v677 = vunpack.c.h.b16 %v216
    %v678 = vunpack.c.l.b16 %v217
    %v679 = vunpack.c.h.b16 %v217
    %v680 = vunpack.c.l.b16 %v218
    %v681 = vunpack.c.h.b16 %v218
    %v682 = vunpack.c.l.b16 %v219
    %v683 = vunpack.c.h.b16 %v219
    %v684 = vunpack.c.l.b16 %v220
    %v685 = vunpack.c.h.b16 %v220
    %v686 = vunpack.c.l.b16 %v221
    %v687 = vunpack.c.h.b16 %v221
    %v688 = vunpack.c.l.b16 %v222
    %v689 = vunpack.c.h.b16 %v222
    %v690 = vunpack.c.l.b16 %v223
    %v691 = vunpack.c.h.b16 %v223
    %v692 = vunpack.c.l.b16 %v224
    %v693 = vunpack.c.h.b16 %v224
    %v694 = vunpack.c.l.b16 %v225
    %v695 = vunpack.c.h.b16 %v225
    %v696 = vunpack.c.l.b16 %v226
    %v697 = vunpack.c.h.b16 %v226
    %v698 = vunpack.c.l.b16 %v227
    %v699 = vunpack.c.h.b16 %v227
    %v700 = vunpack.c.l.b16 %v228
    %v701 = vunpack.c.h.b16 %v228
    %v702 = vunpack.c.l.b16 %v229
    %v703 = vunpack.c.h.b16 %v229
    %v704 = vunpack.c.l.b16 %v230
    %v705 = vunpack.c.h.b16 %v230
    %v706 = vunpack.c.l.b16 %v231
    %v707 = vunpack.c.h.b16 %v231
    %v708 = vunpack.c.l.b16 %v232
    %v709 = vunpack.c.h.b16 %v232
    %v710 = vunpack.c.l.b16 %v233
    %v711 = vunpack.c.h.b16 %v233
    %v712 = vunpack.c.l.b16 %v234
    %v713 = vunpack.c.h.b16 %v234
    %v714 = vunpack.c.l.b16 %v235
    %v715 = vunpack.c.h.b16 %v235
    %v716 = vunpack.c.l.b16 %v236
    %v717 = vunpack.c.h.b16 %v236
    %v718 = vunpack.c.l.b16 %v237
    %v719 = vunpack.c.h.b16 %v237
    %v720 = vunpack.c.l.b16 %v238
    %v721 = vunpack.c.h.b16 %v238
    %v722 = vunpack.c.l.b16 %v239
    %v723 = vunpack.c.h.b16 %v239
    %v724 = vunpack.c.l.b16 %v240
    %v725 = vunpack.c.h.b16 %v240
    %v726 = vunpack.c.l.b16 %v241
    %v727 = vunpack.c.h.b16 %v241
    %v728 = vunpack.c.l.b16 %v242
    %v729 = vunpack.c.h.b16 %v242
    %v730 = vunpack.c.l.b16 %v243
    %v731 = vunpack.c.h.b16 %v243
    %v732 = vunpack.c.l.b16 %v244
    %v733 = vunpack.c.h.b16 %v244
    %v734 = vunpack.c.l.b16 %v245
    %v735 = vunpack.c.h.b16 %v245
    %v736 = vunpack.c.l.b16 %v246
    %v737 = vunpack.c.h.b16 %v246
    %v738 = vunpack.c.l.b16 %v247
    %v739 = vunpack.c.h.b16 %v247
    %v740 = vunpack.c.l.b16 %v248
    %v741 = vunpack.c.h.b16 %v248
    %v742 = vunpack.c.l.b16 %v249
    %v743 = vunpack.c.h.b16 %v249
    %v744 = vunpack.c.l.b16 %v250
    %v745 = vunpack.c.h.b16 %v250
    %v746 = vunpack.c.l.b16 %v251
    %v747 = vunpack.c.h.b16 %v251
    %v748 = vunpack.c.l.b16 %v252
    %v749 = vunpack.c.h.b16 %v252
    %v750 = vunpack.c.l.b16 %v253
    %v751 = vunpack.c.h.b16 %v253
    %v752 = vunpack.c.l.b16 %v254
    %v753 = vunpack.c.h.b16 %v254
    %v754 = vunpack.c.l.b16 %v255
    %v755 = vunpack.c.h.b16 %v255
    %v756 = vunpack.c.l.b16 %v256
    %v757 = vunpack.c.h.b16 %v256
    %v758 = vunpack.c.l.b16 %v257
    %v759 = vunpack.c.h.b16 %v257
    %v760 = vunpack.c.l.b16 %v258
    %v761 = vunpack.c.h.b16 %v258
    %v762 = vunpack.c.l.b16 %v259
    %v763 = vunpack.c.h.b16 %v259
    %v764 = vunpack.c.l.b16 %v260
    %v765 = vunpack.c.h.b16 %v260
    %v766 = vunpack.c.l.b16 %v261
    %v767 = vunpack.c.h.b16 %v261
    %v768 = vunpack.c.l.b16 %v262
    %v769 = vunpack.c.h.b16 %v262
    %v770 = vunpack.c.l.b16 %v263
    %v771 = vunpack.c.h.b16 %v263
    %v772 = vunpack.c.l.b16 %v264
    %v773 = vunpack.c.h.b16 %v264
    %v774 = vunpack.c.l.b16 %v265
    %v775 = vunpack.c.h.b16 %v265
    %v776 = vunpack.c.l.b16 %v266
    %v777 = vunpack.c.h.b16 %v266
    %v778 = vunpack.c.l.b16 %v267
    %v779 = vunpack.c.h.b16 %v267
    %v780 = vunpack.c.l.b16 %v268
    %v781 = vunpack.c.h.b16 %v268
    %v782 = vunpack.c.l.b16 %v269
    %v783 = vunpack.c.h.b16 %v269
    %v784 = vunpack.c.l.b16 %v270
    %v785 = vunpack.c.h.b16 %v270
    %v786 = vunpack.c.l.b16 %v271
    %v787 = vunpack.c.h.b16 %v271
    %v788 = vunpack.c.l.b16 %v272
    %v789 = vunpack.c.h.b16 %v272
    %v790 = vunpack.c.l.b16 %v273
    %v791 = vunpack.c.h.b16 %v273
    %v792 = vunpack.c.l.b16 %v274
    %v793 = vunpack.c.h.b16 %v274
    %v794 = vunpack.c.l.b16 %v275
    %v795 = vunpack.c.h.b16 %v275
    %v796 = vunpack.c.l.b16 %v276
    %v797 = vunpack.c.h.b16 %v276
    %v798 = vunpack.c.l.b16 %v277
    %v799 = vunpack.c.h.b16 %v277
    %v800 = vunpack.c.l.b16 %v278
    %v801 = vunpack.c.h.b16 %v278
    %v802 = vunpack.c.l.b16 %v279
    %v803 = vunpack.c.h.b16 %v279
    %v804 = vunpack.c.l.b16 %v280
    %v805 = vunpack.c.h.b16 %v280
    %v806 = vunpack.c.l.b16 %v281
    %v807 = vunpack.c.h.b16 %v281
    %v808 = vunpack.c.l.b16 %v282
    %v809 = vunpack.c.h.b16 %v282
    %v810 = vunpack.c.l.b16 %v283
    %v811 = vunpack.c.h.b16 %v283
    %v812 = vunpack.c.l.b16 %v284
    %v813 = vunpack.c.h.b16 %v284
    %v814 = vunpack.c.l.b16 %v285
    %v815 = vunpack.c.h.b16 %v285
    %v816 = vunpack.c.l.b16 %v286
    %v817 = vunpack.c.h.b16 %v286
    %v818 = vunpack.c.l.b16 %v287
    %v819 = vunpack.c.h.b16 %v287
    %v820 = vunpack.c.l.b16 %v288
    %v821 = vunpack.c.h.b16 %v288
    %v822 = vunpack.c.l.b16 %v289
    %v823 = vunpack.c.h.b16 %v289
    %v824 = vunpack.c.l.b16 %v290
    %v825 = vunpack.c.h.b16 %v290
    %v826 = vunpack.c.l.b16 %v291
    %v827 = vunpack.c.h.b16 %v291
    %v828 = vunpack.c.l.b16 %v292
    %v829 = vunpack.c.h.b16 %v292
    %v830 = vunpack.c.l.b16 %v293
    %v831 = vunpack.c.h.b16 %v293
    %v832 = vunpack.c.l.b16 %v294
    %v833 = vunpack.c.h.b16 %v294
    %v834 = vunpack.c.l.b16 %v295
    %v835 = vunpack.c.h.b16 %v295
    %v836 = vunpack.c.l.b16 %v296
    %v837 = vunpack.c.h.b16 %v296
    %v838 = vunpack.c.l.b16 %v297
    %v839 = vunpack.c.h.b16 %v297
    %v840 = vunpack.c.l.b16 %v298
    %v841 = vunpack.c.h.b16 %v298
    %v842 = vunpack.c.l.b16 %v299
    %v843 = vunpack.c.h.b16 %v299
    %v844 = vunpack.c.l.b16 %v300
    %v845 = vunpack.c.h.b16 %v300
    %v846 = vunpack.c.l.b16 %v301
    %v847 = vunpack.c.h.b16 %v301
    %v848 = vunpack.c.l.b16 %v302
    %v849 = vunpack.c.h.b16 %v302
    %v850 = vunpack.c.l.b16 %v303
    %v851 = vunpack.c.h.b16 %v303
    %v852 = vunpack.c.l.b16 %v304
    %v853 = vunpack.c.h.b16 %v304
    %v854 = vunpack.c.l.b16 %v305
    %v855 = vunpack.c.h.b16 %v305
    %v856 = vunpack.c.l.b16 %v306
    %v857 = vunpack.c.h.b16 %v306
    %v858 = vunpack.c.l.b16 %v307
    %v859 = vunpack.c.h.b16 %v307
    %v860 = vunpack.c.l.b16 %v308
    %v861 = vunpack.c.h.b16 %v308
    %v862 = vunpack.c.l.b16 %v309
    %v863 = vunpack.c.h.b16 %v309
    %v864 = vunpack.c.l.b16 %v310
    %v865 = vunpack.c.h.b16 %v310
    %v866 = vunpack.c.l.b16 %v311
    %v867 = vunpack.c.h.b16 %v311
    %v868 = vunpack.c.l.b16 %v312
    %v869 = vunpack.c.h.b16 %v312
    %v870 = vunpack.c.l.b16 %v313
    %v871 = vunpack.c.h.b16 %v313
    %v872 = vunpack.c.l.b16 %v314
    %v873 = vunpack.c.h.b16 %v314
    %v874 = vunpack.c.l.b16 %v315
    %v875 = vunpack.c.h.b16 %v315
    %v876 = vunpack.c.l.b16 %v316
    %v877 = vunpack.c.h.b16 %v316
    %v878 = vunpack.c.l.b16 %v317
    %v879 = vunpack.c.h.b16 %v317
    %v880 = vunpack.c.l.b16 %v318
    %v881 = vunpack.c.h.b16 %v318
    %v882 = vunpack.c.l.b16 %v319
    %v883 = vunpack.c.h.b16 %v319
    %v884 = vunpack.c.l.b16 %v320
    %v885 = vunpack.c.h.b16 %v320
    %v886 = vunpack.c.l.b16 %v321
    %v887 = vunpack.c.h.b16 %v321
    %v888 = vunpack.c.l.b16 %v322
    %v889 = vunpack.c.h.b16 %v322
    %v890 = vunpack.c.l.b16 %v323
    %v891 = vunpack.c.h.b16 %v323
    %v892 = vunpack.c.l.b16 %v324
    %v893 = vunpack.c.h.b16 %v324
    %v894 = vunpack.c.l.b16 %v325
    %v895 = vunpack.c.h.b16 %v325
    %v896 = vunpack.c.l.b16 %v326
    %v897 = vunpack.c.h.b16 %v326
    %v898 = vunpack.c.l.b16 %v327
    %v899 = vunpack.c.h.b16 %v327
    %v900 = vunpack.c.l.b16 %v328
    %v901 = vunpack.c.h.b16 %v328
    %v902 = vunpack.c.l.b16 %v329
    %v903 = vunpack.c.h.b16 %v329
    %v904 = vunpack.c.l.b16 %v330
    %v905 = vunpack.c.h.b16 %v330
    %v906 = vunpack.c.l.b16 %v331
    %v907 = vunpack.c.h.b16 %v331
    %v908 = vunpack.c.l.b16 %v332
    %v909 = vunpack.c.h.b16 %v332
    %v910 = vunpack.c.l.b16 %v333
    %v911 = vunpack.c.h.b16 %v333
    %v912 = vunpack.c.l.b16 %v334
    %v913 = vunpack.c.h.b16 %v334
    %v914 = vunpack.c.l.b16 %v335
    %v915 = vunpack.c.h.b16 %v335
    %v916 = vunpack.c.l.b16 %v336
    %v917 = vunpack.c.h.b16 %v336
    %v918 = vunpack.c.l.b16 %v337
    %v919 = vunpack.c.h.b16 %v337
    %v920 = vunpack.c.l.b16 %v338
    %v921 = vunpack.c.h.b16 %v338
    %v922 = vunpack.c.l.b16 %v339
    %v923 = vunpack.c.h.b16 %v339
    %v924 = vunpack.c.l.b16 %v340
    %v925 = vunpack.c.h.b16 %v340
    %v926 = vunpack.c.l.b16 %v341
    %v927 = vunpack.c.h.b16 %v341
    %v928 = vunpack.c.l.b16 %v342
    %v929 = vunpack.c.h.b16 %v342
    %v930 = vunpack.c.l.b16 %v343
    %v931 = vunpack.c.h.b16 %v343
    %v932 = vunpack.c.l.b16 %v344
    %v933 = vunpack.c.h.b16 %v344
    %v934 = vunpack.c.l.b16 %v345
    %v935 = vunpack.c.h.b16 %v345
    %v936 = vunpack.c.l.b16 %v346
    %v937 = vunpack.c.h.b16 %v346
    %v938 = vunpack.c.l.b16 %v347
    %v939 = vunpack.c.h.b16 %v347
    %v940 = vunpack.c.l.b16 %v348
    %v941 = vunpack.c.h.b16 %v348
    %v942 = vunpack.c.l.b16 %v349
    %v943 = vunpack.c.h.b16 %v349
    %v944 = vunpack.c.l.b16 %v350
    %v945 = vunpack.c.h.b16 %v350
    %v946 = vunpack.c.l.b16 %v351
    %v947 = vunpack.c.h.b16 %v351
    %v948 = vunpack.c.l.b16 %v352
    %v949 = vunpack.c.h.b16 %v352
    %v950 = vunpack.c.l.b16 %v353
    %v951 = vunpack.c.h.b16 %v353
    %v952 = vunpack.c.l.b16 %v354
    %v953 = vunpack.c.h.b16 %v354
    %v954 = vunpack.c.l.b16 %v355
    %v955 = vunpack.c.h.b16 %v355
    %v956 = vunpack.c.l.b16 %v356
    %v957 = vunpack.c.h.b16 %v356
    %v958 = vunpack.c.l.b16 %v357
    %v959 = vunpack.c.h.b16 %v357
    %v960 = vunpack.c.l.b16 %v358
    %v961 = vunpack.c.h.b16 %v358
    %v962 = vunpack.c.l.b16 %v359
    %v963 = vunpack.c.h.b16 %v359
    %v964 = vunpack.c.l.b16 %v360
    %v965 = vunpack.c.h.b16 %v360
    %v966 = vunpack.c.l.b16 %v361
    %v967 = vunpack.c.h.b16 %v361
    %v968 = vunpack.c.l.b16 %v362
    %v969 = vunpack.c.h.b16 %v362
    %v970 = vunpack.c.l.b16 %v363
    %v971 = vunpack.c.h.b16 %v363
    %v972 = vunpack.c.l.b16 %v364
    %v973 = vunpack.c.h.b16 %v364
    %v974 = vunpack.c.l.b16 %v365
    %v975 = vunpack.c.h.b16 %v365
    %v976 = vpack.c.b16 %v588, %v584
    %v977 = vpack.c.b16 %v589, %v585
    %v978 = vpack.c.b16 %v590, %v586
    %v979 = vpack.c.b16 %v591, %v587
    %v980 = vpack.c.b16 %v596, %v592
    %v981 = vpack.c.b16 %v597, %v593
    %v982 = vpack.c.b16 %v598, %v594
    %v983 = vpack.c.b16 %v599, %v595
    %v984 = vpack.c.b16 %v604, %v600
    %v985 = vpack.c.b16 %v605, %v601
    %v986 = vpack.c.b16 %v606, %v602
    %v987 = vpack.c.b16 %v607, %v603
    %v988 = vpack.c.b16 %v612, %v608
    %v989 = vpack.c.b16 %v613, %v609
    %v990 = vpack.c.b16 %v614, %v610
    %v991 = vpack.c.b16 %v615, %v611
    %v992 = vpack.c.b16 %v620, %v616
    %v993 = vpack.c.b16 %v621, %v617
    %v994 = vpack.c.b16 %v622, %v618
    %v995 = vpack.c.b16 %v623, %v619
    %v996 = vpack.c.b16 %v628, %v624
    %v997 = vpack.c.b16 %v629, %v625
    %v998 = vpack.c.b16 %v630, %v626
    %v999 = vpack.c.b16 %v631, %v627
    %v1000 = vpack.c.b16 %v636, %v632
    %v1001 = vpack.c.b16 %v637, %v633
    %v1002 = vpack.c.b16 %v638, %v634
    %v1003 = vpack.c.b16 %v639, %v635
    %v1004 = vpack.c.b16 %v644, %v640
    %v1005 = vpack.c.b16 %v645, %v641
    %v1006 = vpack.c.b16 %v646, %v642
    %v1007 = vpack.c.b16 %v647, %v643
    %v1008 = vpack.c.b16 %v652, %v648
    %v1009 = vpack.c.b16 %v653, %v649
    %v1010 = vpack.c.b16 %v654, %v650
    %v1011 = vpack.c.b16 %v655, %v651
    %v1012 = vpack.c.b16 %v660, %v656
    %v1013 = vpack.c.b16 %v661, %v657
    %v1014 = vpack.c.b16 %v662, %v658
    %v1015 = vpack.c.b16 %v663, %v659
    %v1016 = vpack.c.b16 %v668, %v664
    %v1017 = vpack.c.b16 %v669, %v665
    %v1018 = vpack.c.b16 %v670, %v666
    %v1019 = vpack.c.b16 %v671, %v667
    %v1020 = vpack.c.b16 %v676, %v672
    %v1021 = vpack.c.b16 %v677, %v673
    %v1022 = vpack.c.b16 %v678, %v674
    %v1023 = vpack.c.b16 %v679, %v675
    %v1024 = vpack.c.b16 %v684, %v680
    %v1025 = vpack.c.b16 %v685, %v681
    %v1026 = vpack.c.b16 %v686, %v682
    %v1027 = vpack.c.b16 %v687, %v683
    %v1028 = vpack.c.b16 %v692, %v688
    %v1029 = vpack.c.b16 %v693, %v689
    %v1030 = vpack.c.b16 %v694, %v690
    %v1031 = vpack.c.b16 %v695, %v691
    %v1032 = vpack.c.b16 %v700, %v696
    %v1033 = vpack.c.b16 %v701, %v697
    %v1034 = vpack.c.b16 %v702, %v698
    %v1035 = vpack.c.b16 %v703, %v699
    %v1036 = vpack.c.b16 %v708, %v704
    %v1037 = vpack.c.b16 %v709, %v705
    %v1038 = vpack.c.b16 %v710, %v706
    %v1039 = vpack.c.b16 %v711, %v707
    %v1040 = vpack.c.b16 %v716, %v712
    %v1041 = vpack.c.b16 %v717, %v713
    %v1042 = vpack.c.b16 %v718, %v714
    %v1043 = vpack.c.b16 %v719, %v715
    %v1044 = vpack.c.b16 %v724, %v720
    %v1045 = vpack.c.b16 %v725, %v721
    %v1046 = vpack.c.b16 %v726, %v722
    %v1047 = vpack.c.b16 %v727, %v723
    %v1048 = vpack.c.b16 %v732, %v728
    %v1049 = vpack.c.b16 %v733, %v729
    %v1050 = vpack.c.b16 %v734, %v730
    %v1051 = vpack.c.b16 %v735, %v731
    %v1052 = vpack.c.b16 %v740, %v736
    %v1053 = vpack.c.b16 %v741, %v737
    %v1054 = vpack.c.b16 %v742, %v738
    %v1055 = vpack.c.b16 %v743, %v739
    %v1056 = vpack.c.b16 %v748, %v744
    %v1057 = vpack.c.b16 %v749, %v745
    %v1058 = vpack.c.b16 %v750, %v746
    %v1059 = vpack.c.b16 %v751, %v747
    %v1060 = vpack.c.b16 %v756, %v752
    %v1061 = vpack.c.b16 %v757, %v753
    %v1062 = vpack.c.b16 %v758, %v754
    %v1063 = vpack.c.b16 %v759, %v755
    %v1064 = vpack.c.b16 %v764, %v760
    %v1065 = vpack.c.b16 %v765, %v761
    %v1066 = vpack.c.b16 %v766, %v762
    %v1067 = vpack.c.b16 %v767, %v763
    %v1068 = vpack.c.b16 %v772, %v768
    %v1069 = vpack.c.b16 %v773, %v769
    %v1070 = vpack.c.b16 %v774, %v770
    %v1071 = vpack.c.b16 %v775, %v771
    %v1072 = vpack.c.b16 %v780, %v776
    %v1073 = vpack.c.b16 %v781, %v777
    %v1074 = vpack.c.b16 %v782, %v778
    %v1075 = vpack.c.b16 %v783, %v779
    %v1076 = vpack.c.b16 %v788, %v784
    %v1077 = vpack.c.b16 %v789, %v785
    %v1078 = vpack.c.b16 %v790, %v786
    %v1079 = vpack.c.b16 %v791, %v787
    %v1080 = vpack.c.b16 %v796, %v792
    %v1081 = vpack.c.b16 %v797, %v793
    %v1082 = vpack.c.b16 %v798, %v794
    %v1083 = vpack.c.b16 %v799, %v795
    %v1084 = vpack.c.b16 %v804, %v800
    %v1085 = vpack.c.b16 %v805, %v801
    %v1086 = vpack.c.b16 %v806, %v802
    %v1087 = vpack.c.b16 %v807, %v803
    %v1088 = vpack.c.b16 %v812, %v808
    %v1089 = vpack.c.b16 %v813, %v809
    %v1090 = vpack.c.b16 %v814, %v810
    %v1091 = vpack.c.b16 %v815, %v811
    %v1092 = vpack.c.b16 %v820, %v816
    %v1093 = vpack.c.b16 %v821, %v817
    %v1094 = vpack.c.b16 %v822, %v818
    %v1095 = vpack.c.b16 %v823, %v819
    %v1096 = vpack.c.b16 %v828, %v824
    %v1097 = vpack.c.b16 %v829, %v825
    %v1098 = vpack.c.b16 %v830, %v826
    %v1099 = vpack.c.b16 %v831, %v827
    %v1100 = vpack.c.b16 %v836, %v832
    %v1101 = vpack.c.b16 %v837, %v833
    %v1102 = vpack.c.b16 %v838, %v834
    %v1103 = vpack.c.b16 %v839, %v835
    %v1104 = vpack.c.b16 %v844, %v840
    %v1105 = vpack.c.b16 %v845, %v841
    %v1106 = vpack.c.b16 %v846, %v842
    %v1107 = vpack.c.b16 %v847, %v843
    %v1108 = vpack.c.b16 %v852, %v848
    %v1109 = vpack.c.b16 %v853, %v849
    %v1110 = vpack.c.b16 %v854, %v850
    %v1111 = vpack.c.b16 %v855, %v851
    %v1112 = vpack.c.b16 %v860, %v856
    %v1113 = vpack.c.b16 %v861, %v857
    %v1114 = vpack.c.b16 %v862, %v858
    %v1115 = vpack.c.b16 %v863, %v859
    %v1116 = vpack.c.b16 %v868, %v864
    %v1117 = vpack.c.b16 %v869, %v865
    %v1118 = vpack.c.b16 %v870, %v866
    %v1119 = vpack.c.b16 %v871, %v867
    %v1120 = vpack.c.b16 %v876, %v872
    %v1121 = vpack.c.b16 %v877, %v873
    %v1122 = vpack.c.b16 %v878, %v874
    %v1123 = vpack.c.b16 %v879, %v875
    %v1124 = vpack.c.b16 %v884, %v880
    %v1125 = vpack.c.b16 %v885, %v881
    %v1126 = vpack.c.b16 %v886, %v882
    %v1127 = vpack.c.b16 %v887, %v883
    %v1128 = vpack.c.b16 %v892, %v888
    %v1129 = vpack.c.b16 %v893, %v889
    %v1130 = vpack.c.b16 %v894, %v890
    %v1131 = vpack.c.b16 %v895, %v891
    %v1132 = vpack.c.b16 %v900, %v896
    %v1133 = vpack.c.b16 %v901, %v897
    %v1134 = vpack.c.b16 %v902, %v898
    %v1135 = vpack.c.b16 %v903, %v899
    %v1136 = vpack.c.b16 %v908, %v904
    %v1137 = vpack.c.b16 %v909, %v905
    %v1138 = vpack.c.b16 %v910, %v906
    %v1139 = vpack.c.b16 %v911, %v907
    %v1140 = vpack.c.b16 %v916, %v912
    %v1141 = vpack.c.b16 %v917, %v913
    %v1142 = vpack.c.b16 %v918, %v914
    %v1143 = vpack.c.b16 %v919, %v915
    %v1144 = vpack.c.b16 %v924, %v920
    %v1145 = vpack.c.b16 %v925, %v921
    %v1146 = vpack.c.b16 %v926, %v922
    %v1147 = vpack.c.b16 %v927, %v923
    %v1148 = vpack.c.b16 %v932, %v928
    %v1149 = vpack.c.b16 %v933, %v929
    %v1150 = vpack.c.b16 %v934, %v930
    %v1151 = vpack.c.b16 %v935, %v931
    %v1152 = vpack.c.b16 %v940, %v936
    %v1153 = vpack.c.b16 %v941, %v937
    %v1154 = vpack.c.b16 %v942, %v938
    %v1155 = vpack.c.b16 %v943, %v939
    %v1156 = vpack.c.b16 %v948, %v944
    %v1157 = vpack.c.b16 %v949, %v945
    %v1158 = vpack.c.b16 %v950, %v946
    %v1159 = vpack.c.b16 %v951, %v947
    %v1160 = vpack.c.b16 %v956, %v952
    %v1161 = vpack.c.b16 %v957, %v953
    %v1162 = vpack.c.b16 %v958, %v954
    %v1163 = vpack.c.b16 %v959, %v955
    %v1164 = vpack.c.b16 %v964, %v960
    %v1165 = vpack.c.b16 %v965, %v961
    %v1166 = vpack.c.b16 %v966, %v962
    %v1167 = vpack.c.b16 %v967, %v963
    %v1168 = vpack.c.b16 %v972, %v968
    %v1169 = vpack.c.b16 %v973, %v969
    %v1170 = vpack.c.b16 %v974, %v970
    %v1171 = vpack.c.b16 %v975, %v971
    %vm1368 = vcmask 130048
    %v1370 = vsel %vm1368, %v169, 0
    %1372 = vmatprep.subr.bf16.mxu0 %v977
    %1373 = vmatpush1.bf16.msra.mxu0 %v976
    %1374 = vmatprep.subr.bf16.mxu0 %v981
    %1375 = vmatpush1.bf16.msra.mxu0 %v980
    %1376 = vmatprep.subr.bf16.mxu0 %v985
    %1377 = vmatpush1.bf16.msra.mxu0 %v984
    %1378 = vmatprep.subr.bf16.mxu0 %v989
    %1379 = vmatpush1.bf16.msra.mxu0 %v988
    %1380 = vmatprep.subr.bf16.mxu0 %v993
    %1381 = vmatpush1.bf16.msra.mxu0 %v992
    %1382 = vmatprep.subr.bf16.mxu0 %v997
    %1383 = vmatpush1.bf16.msra.mxu0 %v996
    %1384 = vmatprep.subr.bf16.mxu0 %v1001
    %1385 = vmatpush1.bf16.msra.mxu0 %v1000
    %1386 = vmatprep.subr.bf16.mxu0 %v1005
    %1387 = vmatpush1.bf16.msra.mxu0 %v1004
    %1388 = vmatprep.subr.bf16.mxu0 %v1009
    %1389 = vmatpush1.bf16.msra.mxu0 %v1008
    %1390 = vmatprep.subr.bf16.mxu0 %v1013
    %1391 = vmatpush1.bf16.msra.mxu0 %v1012
    %1392 = vmatprep.subr.bf16.mxu0 %v1017
    %1393 = vmatpush1.bf16.msra.mxu0 %v1016
    %1394 = vmatprep.subr.bf16.mxu0 %v1021
    %1395 = vmatpush1.bf16.msra.mxu0 %v1020
    %1396 = vmatprep.subr.bf16.mxu0 %v1025
    %1397 = vmatpush1.bf16.msra.mxu0 %v1024
    %1398 = vmatprep.subr.bf16.mxu0 %v1029
    %1399 = vmatpush1.bf16.msra.mxu0 %v1028
    %1400 = vmatprep.subr.bf16.mxu0 %v1033
    %1401 = vmatpush1.bf16.msra.mxu0 %v1032
    %1402 = vmatprep.subr.bf16.mxu0 %v1037
    %1403 = vmatpush1.bf16.msra.mxu0 %v1036
    %1404 = vmatprep.mubr.bf16.mxu0 %v164
    %1405 = vmatmul.mubr.bf16.gmra.mrb[0].mxu0 %v163
    %v1406 = vpop.f32.mrb[0].mxu0
    %v1407 = vadd.f32 %v371, %v1406
    %v1408 = vpop.f32.mrb[0].mxu0
    %v1409 = vadd.f32 %v375, %v1408
    %v1410 = vpop.f32.mrb[0].mxu0
    %v1411 = vpop.f32.mrb[0].mxu0
    %1412 = vdwg.mxu0
    %1413 = vmatprep.subr.bf16.mxu0 %v1041
    %1414 = vmatpush1.bf16.msra.mxu0 %v1040
    %1415 = vmatprep.subr.bf16.mxu0 %v1045
    %1416 = vmatpush1.bf16.msra.mxu0 %v1044
    %1417 = vmatprep.subr.bf16.mxu0 %v1049
    %1418 = vmatpush1.bf16.msra.mxu0 %v1048
    %1419 = vmatprep.subr.bf16.mxu0 %v1053
    %1420 = vmatpush1.bf16.msra.mxu0 %v1052
    %1421 = vmatprep.subr.bf16.mxu0 %v1057
    %1422 = vmatpush1.bf16.msra.mxu0 %v1056
    %1423 = vmatprep.subr.bf16.mxu0 %v1061
    %1424 = vmatpush1.bf16.msra.mxu0 %v1060
    %1425 = vmatprep.subr.bf16.mxu0 %v1065
    %1426 = vmatpush1.bf16.msra.mxu0 %v1064
    %1427 = vmatprep.subr.bf16.mxu0 %v1069
    %1428 = vmatpush1.bf16.msra.mxu0 %v1068
    %1429 = vmatprep.subr.bf16.mxu0 %v1073
    %1430 = vmatpush1.bf16.msra.mxu0 %v1072
    %1431 = vmatprep.subr.bf16.mxu0 %v1077
    %1432 = vmatpush1.bf16.msra.mxu0 %v1076
    %1433 = vmatprep.subr.bf16.mxu0 %v1081
    %1434 = vmatpush1.bf16.msra.mxu0 %v1080
    %1435 = vmatprep.subr.bf16.mxu0 %v1085
    %1436 = vmatpush1.bf16.msra.mxu0 %v1084
    %1437 = vmatprep.subr.bf16.mxu0 %v1089
    %1438 = vmatpush1.bf16.msra.mxu0 %v1088
    %1439 = vmatprep.subr.bf16.mxu0 %v1093
    %1440 = vmatpush1.bf16.msra.mxu0 %v1092
    %1441 = vmatprep.subr.bf16.mxu0 %v1097
    %1442 = vmatpush1.bf16.msra.mxu0 %v1096
    %1443 = vmatprep.subr.bf16.mxu0 %v1101
    %1444 = vmatpush1.bf16.msra.mxu0 %v1100
    %1445 = vmatprep.mubr.bf16.mxu0 %v166
    %1446 = vmatmul.mubr.bf16.gmra.mrb[0].mxu0 %v165
    %v1447 = vpop.f32.mrb[0].mxu0
    %v1448 = vadd.f32 %v1407, %v1447
    %v1449 = vpop.f32.mrb[0].mxu0
    %v1450 = vadd.f32 %v1409, %v1449
    %v1451 = vpop.f32.mrb[0].mxu0
    %v1452 = vpop.f32.mrb[0].mxu0
    %1453 = vdwg.mxu0
    %1454 = vmatprep.subr.bf16.mxu0 %v1105
    %1455 = vmatpush1.bf16.msra.mxu0 %v1104
    %1456 = vmatprep.subr.bf16.mxu0 %v1109
    %1457 = vmatpush1.bf16.msra.mxu0 %v1108
    %1458 = vmatprep.subr.bf16.mxu0 %v1113
    %1459 = vmatpush1.bf16.msra.mxu0 %v1112
    %1460 = vmatprep.subr.bf16.mxu0 %v1117
    %1461 = vmatpush1.bf16.msra.mxu0 %v1116
    %1462 = vmatprep.subr.bf16.mxu0 %v1121
    %1463 = vmatpush1.bf16.msra.mxu0 %v1120
    %1464 = vmatprep.subr.bf16.mxu0 %v1125
    %1465 = vmatpush1.bf16.msra.mxu0 %v1124
    %1466 = vmatprep.subr.bf16.mxu0 %v1129
    %1467 = vmatpush1.bf16.msra.mxu0 %v1128
    %1468 = vmatprep.subr.bf16.mxu0 %v1133
    %1469 = vmatpush1.bf16.msra.mxu0 %v1132
    %1470 = vmatprep.subr.bf16.mxu0 %v1137
    %1471 = vmatpush1.bf16.msra.mxu0 %v1136
    %1472 = vmatprep.subr.bf16.mxu0 %v1141
    %1473 = vmatpush1.bf16.msra.mxu0 %v1140
    %1474 = vmatprep.subr.bf16.mxu0 %v1145
    %1475 = vmatpush1.bf16.msra.mxu0 %v1144
    %1476 = vmatprep.subr.bf16.mxu0 %v1149
    %1477 = vmatpush1.bf16.msra.mxu0 %v1148
    %1478 = vmatprep.subr.bf16.mxu0 %v1153
    %1479 = vmatpush1.bf16.msra.mxu0 %v1152
    %1480 = vmatprep.subr.bf16.mxu0 %v1157
    %1481 = vmatpush1.bf16.msra.mxu0 %v1156
    %1482 = vmatprep.subr.bf16.mxu0 %v1161
    %1483 = vmatpush1.bf16.msra.mxu0 %v1160
    %1484 = vmatprep.subr.bf16.mxu0 %v1165
    %1485 = vmatpush1.bf16.msra.mxu0 %v1164
    %1486 = vmatprep.mubr.bf16.mxu0 %v168
    %1487 = vmatmul.mubr.bf16.gmra.mrb[0].mxu0 %v167
    %v1488 = vpop.f32.mrb[0].mxu0
    %v1489 = vadd.f32 %v1448, %v1488
    %v1490 = vpop.f32.mrb[0].mxu0
    %v1491 = vadd.f32 %v1450, %v1490
    %v1492 = vpop.f32.mrb[0].mxu0
    %v1493 = vpop.f32.mrb[0].mxu0
    %1494 = vdwg.mxu0
    %1495 = vmatprep.subr.bf16.mxu0 %v1169
    %1496 = vmatpush1.bf16.msra.mxu0 %v1168
    %1497 = vmatprep.subr.bf16.mxu0 0
    %1498 = vmatpush1.bf16.msra.mxu0 0
    %1499 = vmatprep.subr.bf16.mxu0 0
    %1500 = vmatpush1.bf16.msra.mxu0 0
    %1501 = vmatprep.subr.bf16.mxu0 0
    %1502 = vmatpush1.bf16.msra.mxu0 0
    %1503 = vmatprep.subr.bf16.mxu0 0
    %1504 = vmatpush1.bf16.msra.mxu0 0
    %1505 = vmatprep.subr.bf16.mxu0 0
    %1506 = vmatpush1.bf16.msra.mxu0 0
    %1507 = vmatprep.subr.bf16.mxu0 0
    %1508 = vmatpush1.bf16.msra.mxu0 0
    %1509 = vmatprep.subr.bf16.mxu0 0
    %1510 = vmatpush1.bf16.msra.mxu0 0
    %1511 = vmatprep.subr.bf16.mxu0 0
    %1512 = vmatpush1.bf16.msra.mxu0 0
    %1513 = vmatprep.subr.bf16.mxu0 0
    %1514 = vmatpush1.bf16.msra.mxu0 0
    %1515 = vmatprep.subr.bf16.mxu0 0
    %1516 = vmatpush1.bf16.msra.mxu0 0
    %1517 = vmatprep.subr.bf16.mxu0 0
    %1518 = vmatpush1.bf16.msra.mxu0 0
    %1519 = vmatprep.subr.bf16.mxu0 0
    %1520 = vmatpush1.bf16.msra.mxu0 0
    %1521 = vmatprep.subr.bf16.mxu0 0
    %1522 = vmatpush1.bf16.msra.mxu0 0
    %1523 = vmatprep.subr.bf16.mxu0 0
    %1524 = vmatpush1.bf16.msra.mxu0 0
    %1525 = vmatprep.subr.bf16.mxu0 0
    %1526 = vmatpush1.bf16.msra.mxu0 0
    %1527 = vmatprep.mubr.bf16.mxu0 0
    %1528 = vmatmul.mubr.bf16.gmra.mrb[0].mxu0 %v1370
    %v1529 = vpop.f32.mrb[0].mxu0
    %v1530 = vadd.f32 %v1489, %v1529
    %v1531 = vpop.f32.mrb[0].mxu0
    %v1532 = vadd.f32 %v1491, %v1531
    %v1533 = vpop.f32.mrb[0].mxu0
    %v1534 = vpop.f32.mrb[0].mxu0
    %1535 = vdwg.mxu0
    %1536 = vmatprep.subr.bf16.mxu0 %v979
    %1537 = vmatpush1.bf16.msra.mxu0 %v978
    %1538 = vmatprep.subr.bf16.mxu0 %v983
    %1539 = vmatpush1.bf16.msra.mxu0 %v982
    %1540 = vmatprep.subr.bf16.mxu0 %v987
    %1541 = vmatpush1.bf16.msra.mxu0 %v986
    %1542 = vmatprep.subr.bf16.mxu0 %v991
    %1543 = vmatpush1.bf16.msra.mxu0 %v990
    %1544 = vmatprep.subr.bf16.mxu0 %v995
    %1545 = vmatpush1.bf16.msra.mxu0 %v994
    %1546 = vmatprep.subr.bf16.mxu0 %v999
    %1547 = vmatpush1.bf16.msra.mxu0 %v998
    %1548 = vmatprep.subr.bf16.mxu0 %v1003
    %1549 = vmatpush1.bf16.msra.mxu0 %v1002
    %1550 = vmatprep.subr.bf16.mxu0 %v1007
    %1551 = vmatpush1.bf16.msra.mxu0 %v1006
    %1552 = vmatprep.subr.bf16.mxu0 %v1011
    %1553 = vmatpush1.bf16.msra.mxu0 %v1010
    %1554 = vmatprep.subr.bf16.mxu0 %v1015
    %1555 = vmatpush1.bf16.msra.mxu0 %v1014
    %1556 = vmatprep.subr.bf16.mxu0 %v1019
    %1557 = vmatpush1.bf16.msra.mxu0 %v1018
    %1558 = vmatprep.subr.bf16.mxu0 %v1023
    %1559 = vmatpush1.bf16.msra.mxu0 %v1022
    %1560 = vmatprep.subr.bf16.mxu0 %v1027
    %1561 = vmatpush1.bf16.msra.mxu0 %v1026
    %1562 = vmatprep.subr.bf16.mxu0 %v1031
    %1563 = vmatpush1.bf16.msra.mxu0 %v1030
    %1564 = vmatprep.subr.bf16.mxu0 %v1035
    %1565 = vmatpush1.bf16.msra.mxu0 %v1034
    %1566 = vmatprep.subr.bf16.mxu0 %v1039
    %1567 = vmatpush1.bf16.msra.mxu0 %v1038
    %1568 = vmatprep.mubr.bf16.mxu0 %v164
    %1569 = vmatmul.mubr.bf16.gmra.mrb[0].mxu0 %v163
    %v1570 = vpop.f32.mrb[0].mxu0
    %v1571 = vadd.f32 %v379, %v1570
    %v1572 = vpop.f32.mrb[0].mxu0
    %v1573 = vadd.f32 %v383, %v1572
    %v1574 = vpop.f32.mrb[0].mxu0
    %v1575 = vpop.f32.mrb[0].mxu0
    %1576 = vdwg.mxu0
    %1577 = vmatprep.subr.bf16.mxu0 %v1043
    %1578 = vmatpush1.bf16.msra.mxu0 %v1042
    %1579 = vmatprep.subr.bf16.mxu0 %v1047
    %1580 = vmatpush1.bf16.msra.mxu0 %v1046
    %1581 = vmatprep.subr.bf16.mxu0 %v1051
    %1582 = vmatpush1.bf16.msra.mxu0 %v1050
    %1583 = vmatprep.subr.bf16.mxu0 %v1055
    %1584 = vmatpush1.bf16.msra.mxu0 %v1054
    %1585 = vmatprep.subr.bf16.mxu0 %v1059
    %1586 = vmatpush1.bf16.msra.mxu0 %v1058
    %1587 = vmatprep.subr.bf16.mxu0 %v1063
    %1588 = vmatpush1.bf16.msra.mxu0 %v1062
    %1589 = vmatprep.subr.bf16.mxu0 %v1067
    %1590 = vmatpush1.bf16.msra.mxu0 %v1066
    %1591 = vmatprep.subr.bf16.mxu0 %v1071
    %1592 = vmatpush1.bf16.msra.mxu0 %v1070
    %1593 = vmatprep.subr.bf16.mxu0 %v1075
    %1594 = vmatpush1.bf16.msra.mxu0 %v1074
    %1595 = vmatprep.subr.bf16.mxu0 %v1079
    %1596 = vmatpush1.bf16.msra.mxu0 %v1078
    %1597 = vmatprep.subr.bf16.mxu0 %v1083
    %1598 = vmatpush1.bf16.msra.mxu0 %v1082
    %1599 = vmatprep.subr.bf16.mxu0 %v1087
    %1600 = vmatpush1.bf16.msra.mxu0 %v1086
    %1601 = vmatprep.subr.bf16.mxu0 %v1091
    %1602 = vmatpush1.bf16.msra.mxu0 %v1090
    %1603 = vmatprep.subr.bf16.mxu0 %v1095
    %1604 = vmatpush1.bf16.msra.mxu0 %v1094
    %1605 = vmatprep.subr.bf16.mxu0 %v1099
    %1606 = vmatpush1.bf16.msra.mxu0 %v1098
    %1607 = vmatprep.subr.bf16.mxu0 %v1103
    %1608 = vmatpush1.bf16.msra.mxu0 %v1102
    %1609 = vmatprep.mubr.bf16.mxu0 %v166
    %1610 = vmatmul.mubr.bf16.gmra.mrb[0].mxu0 %v165
    %v1611 = vpop.f32.mrb[0].mxu0
    %v1612 = vadd.f32 %v1571, %v1611
    %v1613 = vpop.f32.mrb[0].mxu0
    %v1614 = vadd.f32 %v1573, %v1613
    %v1615 = vpop.f32.mrb[0].mxu0
    %v1616 = vpop.f32.mrb[0].mxu0
    %1617 = vdwg.mxu0
    %1618 = vmatprep.subr.bf16.mxu0 %v1107
    %1619 = vmatpush1.bf16.msra.mxu0 %v1106
    %1620 = vmatprep.subr.bf16.mxu0 %v1111
    %1621 = vmatpush1.bf16.msra.mxu0 %v1110
    %1622 = vmatprep.subr.bf16.mxu0 %v1115
    %1623 = vmatpush1.bf16.msra.mxu0 %v1114
    %1624 = vmatprep.subr.bf16.mxu0 %v1119
    %1625 = vmatpush1.bf16.msra.mxu0 %v1118
    %1626 = vmatprep.subr.bf16.mxu0 %v1123
    %1627 = vmatpush1.bf16.msra.mxu0 %v1122
    %1628 = vmatprep.subr.bf16.mxu0 %v1127
    %1629 = vmatpush1.bf16.msra.mxu0 %v1126
    %1630 = vmatprep.subr.bf16.mxu0 %v1131
    %1631 = vmatpush1.bf16.msra.mxu0 %v1130
    %1632 = vmatprep.subr.bf16.mxu0 %v1135
    %1633 = vmatpush1.bf16.msra.mxu0 %v1134
    %1634 = vmatprep.subr.bf16.mxu0 %v1139
    %1635 = vmatpush1.bf16.msra.mxu0 %v1138
    %1636 = vmatprep.subr.bf16.mxu0 %v1143
    %1637 = vmatpush1.bf16.msra.mxu0 %v1142
    %1638 = vmatprep.subr.bf16.mxu0 %v1147
    %1639 = vmatpush1.bf16.msra.mxu0 %v1146
    %1640 = vmatprep.subr.bf16.mxu0 %v1151
    %1641 = vmatpush1.bf16.msra.mxu0 %v1150
    %1642 = vmatprep.subr.bf16.mxu0 %v1155
    %1643 = vmatpush1.bf16.msra.mxu0 %v1154
    %1644 = vmatprep.subr.bf16.mxu0 %v1159
    %1645 = vmatpush1.bf16.msra.mxu0 %v1158
    %1646 = vmatprep.subr.bf16.mxu0 %v1163
    %1647 = vmatpush1.bf16.msra.mxu0 %v1162
    %1648 = vmatprep.subr.bf16.mxu0 %v1167
    %1649 = vmatpush1.bf16.msra.mxu0 %v1166
    %1650 = vmatprep.mubr.bf16.mxu0 %v168
    %1651 = vmatmul.mubr.bf16.gmra.mrb[0].mxu0 %v167
    %v1652 = vpop.f32.mrb[0].mxu0
    %v1653 = vadd.f32 %v1612, %v1652
    %v1654 = vpop.f32.mrb[0].mxu0
    %v1655 = vadd.f32 %v1614, %v1654
    %v1656 = vpop.f32.mrb[0].mxu0
    %v1657 = vpop.f32.mrb[0].mxu0
    %1658 = vdwg.mxu0
    %1659 = vmatprep.subr.bf16.mxu0 %v1171
    %1660 = vmatpush1.bf16.msra.mxu0 %v1170
    %1661 = vmatprep.subr.bf16.mxu0 0
    %1662 = vmatpush1.bf16.msra.mxu0 0
    %1663 = vmatprep.subr.bf16.mxu0 0
    %1664 = vmatpush1.bf16.msra.mxu0 0
    %1665 = vmatprep.subr.bf16.mxu0 0
    %1666 = vmatpush1.bf16.msra.mxu0 0
    %1667 = vmatprep.subr.bf16.mxu0 0
    %1668 = vmatpush1.bf16.msra.mxu0 0
    %1669 = vmatprep.subr.bf16.mxu0 0
    %1670 = vmatpush1.bf16.msra.mxu0 0
    %1671 = vmatprep.subr.bf16.mxu0 0
    %1672 = vmatpush1.bf16.msra.mxu0 0
    %1673 = vmatprep.subr.bf16.mxu0 0
    %1674 = vmatpush1.bf16.msra.mxu0 0
    %1675 = vmatprep.subr.bf16.mxu0 0
    %1676 = vmatpush1.bf16.msra.mxu0 0
    %1677 = vmatprep.subr.bf16.mxu0 0
    %1678 = vmatpush1.bf16.msra.mxu0 0
    %1679 = vmatprep.subr.bf16.mxu0 0
    %1680 = vmatpush1.bf16.msra.mxu0 0
    %1681 = vmatprep.subr.bf16.mxu0 0
    %1682 = vmatpush1.bf16.msra.mxu0 0
    %1683 = vmatprep.subr.bf16.mxu0 0
    %1684 = vmatpush1.bf16.msra.mxu0 0
    %1685 = vmatprep.subr.bf16.mxu0 0
    %1686 = vmatpush1.bf16.msra.mxu0 0
    %1687 = vmatprep.subr.bf16.mxu0 0
    %1688 = vmatpush1.bf16.msra.mxu0 0
    %1689 = vmatprep.subr.bf16.mxu0 0
    %1690 = vmatpush1.bf16.msra.mxu0 0
    %1691 = vmatprep.mubr.bf16.mxu0 0
    %1692 = vmatmul.mubr.bf16.gmra.mrb[0].mxu0 %v1370
    %v1693 = vpop.f32.mrb[0].mxu0
    %v1694 = vadd.f32 %v1653, %v1693
    %v1695 = vpop.f32.mrb[0].mxu0
    %v1696 = vadd.f32 %v1655, %v1695
    %v1697 = vpop.f32.mrb[0].mxu0
    %v1698 = vpop.f32.mrb[0].mxu0
    %1699 = vdwg.mxu0
    %v1700 = vmax.f32 %v1530, 0.0
    %v1701 = vmax.f32 %v1532, 0.0
    %v1702 = vmax.f32 %v1694, 0.0
    %v1703 = vmax.f32 %v1696, 0.0
    %v1704 = vpack.c.bf16 %v1700, %v1700
    %v1705 = vpack.c.bf16 %v1701, %v1701
    %v1706 = vpack.c.bf16 %v1702, %v1702
    %v1707 = vpack.c.bf16 %v1703, %v1703
    %v1708 = vld [vmem:[#allocation5] sm:$0xff]
    %v1709 = vld [vmem:[#allocation5 + $0x8] sm:$0xff]
    %v1710 = vld [vmem:[#allocation5 + $0x10] sm:$0xff]
    %v1711 = vld [vmem:[#allocation5 + $0x18] sm:$0xff]
    %v1712 = vld [vmem:[#allocation5 + $0x20] sm:$0xff]
    %v1713 = vld [vmem:[#allocation5 + $0x28] sm:$0xff]
    %v1714 = vld [vmem:[#allocation5 + $0x30] sm:$0xff]
    %v1715 = vld [vmem:[#allocation5 + $0x38] sm:$0xff]
    %v1716 = vld [vmem:[#allocation5 + $0x40] sm:$0xff]
    %v1717 = vld [vmem:[#allocation5 + $0x48] sm:$0xff]
    %v1718 = vld [vmem:[#allocation5 + $0x50] sm:$0xff]
    %v1719 = vld [vmem:[#allocation5 + $0x58] sm:$0xff]
    %v1720 = vld [vmem:[#allocation5 + $0x60] sm:$0xff]
    %v1721 = vld [vmem:[#allocation5 + $0x68] sm:$0xff]
    %v1722 = vld [vmem:[#allocation5 + $0x70] sm:$0xff]
    %v1723 = vld [vmem:[#allocation5 + $0x78] sm:$0xff]
    %v1724 = vld [vmem:[#allocation5 + $0x80] sm:$0xff]
    %v1725 = vld [vmem:[#allocation5 + $0x88] sm:$0xff]
    %v1726 = vld [vmem:[#allocation5 + $0x90] sm:$0xff]
    %v1727 = vld [vmem:[#allocation5 + $0x98] sm:$0xff]
    %v1728 = vld [vmem:[#allocation5 + $0xa0] sm:$0xff]
    %v1729 = vld [vmem:[#allocation5 + $0xa8] sm:$0xff]
    %v1730 = vld [vmem:[#allocation5 + $0xb0] sm:$0xff]
    %v1731 = vld [vmem:[#allocation5 + $0xb8] sm:$0xff]
    %v1732 = vld [vmem:[#allocation5 + $0xc0] sm:$0xff]
    %v1733 = vld [vmem:[#allocation5 + $0xc8] sm:$0xff]
    %v1734 = vld [vmem:[#allocation5 + $0xd0] sm:$0xff]
    %v1735 = vld [vmem:[#allocation5 + $0xd8] sm:$0xff]
    %v1736 = vld [vmem:[#allocation5 + $0xe0] sm:$0xff]
    %v1737 = vld [vmem:[#allocation5 + $0xe8] sm:$0xff]
    %v1738 = vld [vmem:[#allocation5 + $0xf0] sm:$0xff]
    %v1739 = vld [vmem:[#allocation5 + $0xf8] sm:$0xff]
    %v1740 = vld [vmem:[#allocation5 + $0x100] sm:$0xff]
    %v1741 = vld [vmem:[#allocation5 + $0x108] sm:$0xff]
    %v1742 = vld [vmem:[#allocation5 + $0x110] sm:$0xff]
    %v1743 = vld [vmem:[#allocation5 + $0x118] sm:$0xff]
    %v1744 = vld [vmem:[#allocation5 + $0x120] sm:$0xff]
    %v1745 = vld [vmem:[#allocation5 + $0x128] sm:$0xff]
    %v1746 = vld [vmem:[#allocation5 + $0x130] sm:$0xff]
    %v1747 = vld [vmem:[#allocation5 + $0x138] sm:$0xff]
    %v1748 = vld [vmem:[#allocation5 + $0x140] sm:$0xff]
    %v1749 = vld [vmem:[#allocation5 + $0x148] sm:$0xff]
    %v1750 = vld [vmem:[#allocation5 + $0x150] sm:$0xff]
    %v1751 = vld [vmem:[#allocation5 + $0x158] sm:$0xff]
    %v1752 = vld [vmem:[#allocation5 + $0x160] sm:$0xff]
    %v1753 = vld [vmem:[#allocation5 + $0x168] sm:$0xff]
    %v1754 = vld [vmem:[#allocation5 + $0x170] sm:$0xff]
    %v1755 = vld [vmem:[#allocation5 + $0x178] sm:$0xff]
    %v1756 = vld [vmem:[#allocation5 + $0x180] sm:$0xff]
    %v1757 = vld [vmem:[#allocation5 + $0x188] sm:$0xff]
    %v1758 = vld [vmem:[#allocation5 + $0x190] sm:$0xff]
    %v1759 = vld [vmem:[#allocation5 + $0x198] sm:$0xff]
    %v1760 = vld [vmem:[#allocation5 + $0x1a0] sm:$0xff]
    %v1761 = vld [vmem:[#allocation5 + $0x1a8] sm:$0xff]
    %v1762 = vld [vmem:[#allocation5 + $0x1b0] sm:$0xff]
    %v1763 = vld [vmem:[#allocation5 + $0x1b8] sm:$0xff]
    %v1764 = vld [vmem:[#allocation5 + $0x1c0] sm:$0xff]
    %v1765 = vld [vmem:[#allocation5 + $0x1c8] sm:$0xff]
    %v1766 = vld [vmem:[#allocation5 + $0x1d0] sm:$0xff]
    %v1767 = vld [vmem:[#allocation5 + $0x1d8] sm:$0xff]
    %v1768 = vld [vmem:[#allocation5 + $0x1e0] sm:$0xff]
    %v1769 = vld [vmem:[#allocation5 + $0x1e8] sm:$0xff]
    %v1770 = vld [vmem:[#allocation5 + $0x1f0] sm:$0xff]
    %v1771 = vld [vmem:[#allocation5 + $0x1f8] sm:$0xff]
    %v1772 = vld [vmem:[#allocation5 + $0x200] sm:$0xff]
    %v1773 = vld [vmem:[#allocation5 + $0x208] sm:$0xff]
    %v1774 = vld [vmem:[#allocation5 + $0x210] sm:$0xff]
    %v1775 = vld [vmem:[#allocation5 + $0x218] sm:$0xff]
    %v1776 = vld [vmem:[#allocation5 + $0x220] sm:$0xff]
    %v1777 = vld [vmem:[#allocation5 + $0x228] sm:$0xff]
    %v1778 = vld [vmem:[#allocation5 + $0x230] sm:$0xff]
    %v1779 = vld [vmem:[#allocation5 + $0x238] sm:$0xff]
    %v1780 = vld [vmem:[#allocation5 + $0x240] sm:$0xff]
    %v1781 = vld [vmem:[#allocation5 + $0x248] sm:$0xff]
    %v1782 = vld [vmem:[#allocation5 + $0x250] sm:$0xff]
    %v1783 = vld [vmem:[#allocation5 + $0x258] sm:$0xff]
    %v1784 = vld [vmem:[#allocation5 + $0x260] sm:$0xff]
    %v1785 = vld [vmem:[#allocation5 + $0x268] sm:$0xff]
    %v1786 = vld [vmem:[#allocation5 + $0x270] sm:$0xff]
    %v1787 = vld [vmem:[#allocation5 + $0x278] sm:$0xff]
    %v1788 = vld [vmem:[#allocation5 + $0x280] sm:$0xff]
    %v1789 = vld [vmem:[#allocation5 + $0x288] sm:$0xff]
    %v1790 = vld [vmem:[#allocation5 + $0x290] sm:$0xff]
    %v1791 = vld [vmem:[#allocation5 + $0x298] sm:$0xff]
    %v1792 = vld [vmem:[#allocation5 + $0x2a0] sm:$0xff]
    %v1793 = vld [vmem:[#allocation5 + $0x2a8] sm:$0xff]
    %v1794 = vld [vmem:[#allocation5 + $0x2b0] sm:$0xff]
    %v1795 = vld [vmem:[#allocation5 + $0x2b8] sm:$0xff]
    %v1796 = vld [vmem:[#allocation5 + $0x2c0] sm:$0xff]
    %v1797 = vld [vmem:[#allocation5 + $0x2c8] sm:$0xff]
    %v1798 = vld [vmem:[#allocation5 + $0x2d0] sm:$0xff]
    %v1799 = vld [vmem:[#allocation5 + $0x2d8] sm:$0xff]
    %v1800 = vld [vmem:[#allocation5 + $0x2e0] sm:$0xff]
    %v1801 = vld [vmem:[#allocation5 + $0x2e8] sm:$0xff]
    %v1802 = vld [vmem:[#allocation5 + $0x2f0] sm:$0xff]
    %v1803 = vld [vmem:[#allocation5 + $0x2f8] sm:$0xff]
    %v1804 = vld [vmem:[#allocation5 + $0x300] sm:$0xff]
    %v1805 = vld [vmem:[#allocation5 + $0x308] sm:$0xff]
    %v1806 = vld [vmem:[#allocation5 + $0x310] sm:$0xff]
    %v1807 = vld [vmem:[#allocation5 + $0x318] sm:$0xff]
    %v1808 = vld [vmem:[#allocation5 + $0x320] sm:$0xff]
    %v1809 = vld [vmem:[#allocation5 + $0x328] sm:$0xff]
    %v1810 = vld [vmem:[#allocation5 + $0x330] sm:$0xff]
    %v1811 = vld [vmem:[#allocation5 + $0x338] sm:$0xff]
    %v1812 = vld [vmem:[#allocation5 + $0x340] sm:$0xff]
    %v1813 = vld [vmem:[#allocation5 + $0x348] sm:$0xff]
    %v1814 = vld [vmem:[#allocation5 + $0x350] sm:$0xff]
    %v1815 = vld [vmem:[#allocation5 + $0x358] sm:$0xff]
    %v1816 = vld [vmem:[#allocation5 + $0x360] sm:$0xff]
    %v1817 = vld [vmem:[#allocation5 + $0x368] sm:$0xff]
    %v1818 = vld [vmem:[#allocation5 + $0x370] sm:$0xff]
    %v1819 = vld [vmem:[#allocation5 + $0x378] sm:$0xff]
    %v1820 = vld [vmem:[#allocation5 + $0x380] sm:$0xff]
    %v1821 = vld [vmem:[#allocation5 + $0x388] sm:$0xff]
    %v1822 = vld [vmem:[#allocation5 + $0x390] sm:$0xff]
    %v1823 = vld [vmem:[#allocation5 + $0x398] sm:$0xff]
    %v1824 = vld [vmem:[#allocation5 + $0x3a0] sm:$0xff]
    %v1825 = vld [vmem:[#allocation5 + $0x3a8] sm:$0xff]
    %v1826 = vld [vmem:[#allocation5 + $0x3b0] sm:$0xff]
    %v1827 = vld [vmem:[#allocation5 + $0x3b8] sm:$0xff]
    %v1828 = vld [vmem:[#allocation5 + $0x3c0] sm:$0xff]
    %v1829 = vld [vmem:[#allocation5 + $0x3c8] sm:$0xff]
    %v1830 = vld [vmem:[#allocation5 + $0x3d0] sm:$0xff]
    %v1831 = vld [vmem:[#allocation5 + $0x3d8] sm:$0xff]
    %v1832 = vld [vmem:[#allocation5 + $0x3e0] sm:$0xff]
    %v1833 = vld [vmem:[#allocation5 + $0x3e8] sm:$0xff]
    %v1834 = vld [vmem:[#allocation5 + $0x3f0] sm:$0xff]
    %v1835 = vld [vmem:[#allocation5 + $0x3f8] sm:$0xff]
    %v1836 = vld [vmem:[%s4] sm:$0xf]
    %v1838 = vlaneseq
    %v1839 = vshrl.u32 %v1838, 7
    %v1840 = vsub.s32 0, %v1839
    %v1841 = vrot.slane %v1836, %v1840
    %v1842 = vlaneseq
    %v1843 = vshrl.u32 %v1842, 7
    %v1844 = vsub.s32 1, %v1843
    %v1845 = vrot.slane %v1836, %v1844
    %v1846 = vlaneseq
    %v1847 = vshrl.u32 %v1846, 7
    %v1848 = vsub.s32 2, %v1847
    %v1849 = vrot.slane %v1836, %v1848
    %v1850 = vlaneseq
    %v1851 = vshrl.u32 %v1850, 7
    %v1852 = vsub.s32 3, %v1851
    %v1853 = vrot.slane %v1836, %v1852
    %v1986 = vunpack.c.l.b16 %v1708
    %v1987 = vunpack.c.h.b16 %v1708
    %v1988 = vunpack.c.l.b16 %v1709
    %v1989 = vunpack.c.h.b16 %v1709
    %v1990 = vunpack.c.l.b16 %v1710
    %v1991 = vunpack.c.h.b16 %v1710
    %v1992 = vunpack.c.l.b16 %v1711
    %v1993 = vunpack.c.h.b16 %v1711
    %v1994 = vunpack.c.l.b16 %v1712
    %v1995 = vunpack.c.h.b16 %v1712
    %v1996 = vunpack.c.l.b16 %v1713
    %v1997 = vunpack.c.h.b16 %v1713
    %v1998 = vunpack.c.l.b16 %v1714
    %v1999 = vunpack.c.h.b16 %v1714
    %v2000 = vunpack.c.l.b16 %v1715
    %v2001 = vunpack.c.h.b16 %v1715
    %v2002 = vunpack.c.l.b16 %v1716
    %v2003 = vunpack.c.h.b16 %v1716
    %v2004 = vunpack.c.l.b16 %v1717
    %v2005 = vunpack.c.h.b16 %v1717
    %v2006 = vunpack.c.l.b16 %v1718
    %v2007 = vunpack.c.h.b16 %v1718
    %v2008 = vunpack.c.l.b16 %v1719
    %v2009 = vunpack.c.h.b16 %v1719
    %v2010 = vunpack.c.l.b16 %v1720
    %v2011 = vunpack.c.h.b16 %v1720
    %v2012 = vunpack.c.l.b16 %v1721
    %v2013 = vunpack.c.h.b16 %v1721
    %v2014 = vunpack.c.l.b16 %v1722
    %v2015 = vunpack.c.h.b16 %v1722
    %v2016 = vunpack.c.l.b16 %v1723
    %v2017 = vunpack.c.h.b16 %v1723
    %v2018 = vunpack.c.l.b16 %v1724
    %v2019 = vunpack.c.h.b16 %v1724
    %v2020 = vunpack.c.l.b16 %v1725
    %v2021 = vunpack.c.h.b16 %v1725
    %v2022 = vunpack.c.l.b16 %v1726
    %v2023 = vunpack.c.h.b16 %v1726
    %v2024 = vunpack.c.l.b16 %v1727
    %v2025 = vunpack.c.h.b16 %v1727
    %v2026 = vunpack.c.l.b16 %v1728
    %v2027 = vunpack.c.h.b16 %v1728
    %v2028 = vunpack.c.l.b16 %v1729
    %v2029 = vunpack.c.h.b16 %v1729
    %v2030 = vunpack.c.l.b16 %v1730
    %v2031 = vunpack.c.h.b16 %v1730
    %v2032 = vunpack.c.l.b16 %v1731
    %v2033 = vunpack.c.h.b16 %v1731
    %v2034 = vunpack.c.l.b16 %v1732
    %v2035 = vunpack.c.h.b16 %v1732
    %v2036 = vunpack.c.l.b16 %v1733
    %v2037 = vunpack.c.h.b16 %v1733
    %v2038 = vunpack.c.l.b16 %v1734
    %v2039 = vunpack.c.h.b16 %v1734
    %v2040 = vunpack.c.l.b16 %v1735
    %v2041 = vunpack.c.h.b16 %v1735
    %v2042 = vunpack.c.l.b16 %v1736
    %v2043 = vunpack.c.h.b16 %v1736
    %v2044 = vunpack.c.l.b16 %v1737
    %v2045 = vunpack.c.h.b16 %v1737
    %v2046 = vunpack.c.l.b16 %v1738
    %v2047 = vunpack.c.h.b16 %v1738
    %v2048 = vunpack.c.l.b16 %v1739
    %v2049 = vunpack.c.h.b16 %v1739
    %v2050 = vunpack.c.l.b16 %v1740
    %v2051 = vunpack.c.h.b16 %v1740
    %v2052 = vunpack.c.l.b16 %v1741
    %v2053 = vunpack.c.h.b16 %v1741
    %v2054 = vunpack.c.l.b16 %v1742
    %v2055 = vunpack.c.h.b16 %v1742
    %v2056 = vunpack.c.l.b16 %v1743
    %v2057 = vunpack.c.h.b16 %v1743
    %v2058 = vunpack.c.l.b16 %v1744
    %v2059 = vunpack.c.h.b16 %v1744
    %v2060 = vunpack.c.l.b16 %v1745
    %v2061 = vunpack.c.h.b16 %v1745
    %v2062 = vunpack.c.l.b16 %v1746
    %v2063 = vunpack.c.h.b16 %v1746
    %v2064 = vunpack.c.l.b16 %v1747
    %v2065 = vunpack.c.h.b16 %v1747
    %v2066 = vunpack.c.l.b16 %v1748
    %v2067 = vunpack.c.h.b16 %v1748
    %v2068 = vunpack.c.l.b16 %v1749
    %v2069 = vunpack.c.h.b16 %v1749
    %v2070 = vunpack.c.l.b16 %v1750
    %v2071 = vunpack.c.h.b16 %v1750
    %v2072 = vunpack.c.l.b16 %v1751
    %v2073 = vunpack.c.h.b16 %v1751
    %v2074 = vunpack.c.l.b16 %v1752
    %v2075 = vunpack.c.h.b16 %v1752
    %v2076 = vunpack.c.l.b16 %v1753
    %v2077 = vunpack.c.h.b16 %v1753
    %v2078 = vunpack.c.l.b16 %v1754
    %v2079 = vunpack.c.h.b16 %v1754
    %v2080 = vunpack.c.l.b16 %v1755
    %v2081 = vunpack.c.h.b16 %v1755
    %v2082 = vunpack.c.l.b16 %v1756
    %v2083 = vunpack.c.h.b16 %v1756
    %v2084 = vunpack.c.l.b16 %v1757
    %v2085 = vunpack.c.h.b16 %v1757
    %v2086 = vunpack.c.l.b16 %v1758
    %v2087 = vunpack.c.h.b16 %v1758
    %v2088 = vunpack.c.l.b16 %v1759
    %v2089 = vunpack.c.h.b16 %v1759
    %v2090 = vunpack.c.l.b16 %v1760
    %v2091 = vunpack.c.h.b16 %v1760
    %v2092 = vunpack.c.l.b16 %v1761
    %v2093 = vunpack.c.h.b16 %v1761
    %v2094 = vunpack.c.l.b16 %v1762
    %v2095 = vunpack.c.h.b16 %v1762
    %v2096 = vunpack.c.l.b16 %v1763
    %v2097 = vunpack.c.h.b16 %v1763
    %v2098 = vunpack.c.l.b16 %v1764
    %v2099 = vunpack.c.h.b16 %v1764
    %v2100 = vunpack.c.l.b16 %v1765
    %v2101 = vunpack.c.h.b16 %v1765
    %v2102 = vunpack.c.l.b16 %v1766
    %v2103 = vunpack.c.h.b16 %v1766
    %v2104 = vunpack.c.l.b16 %v1767
    %v2105 = vunpack.c.h.b16 %v1767
    %v2106 = vunpack.c.l.b16 %v1768
    %v2107 = vunpack.c.h.b16 %v1768
    %v2108 = vunpack.c.l.b16 %v1769
    %v2109 = vunpack.c.h.b16 %v1769
    %v2110 = vunpack.c.l.b16 %v1770
    %v2111 = vunpack.c.h.b16 %v1770
    %v2112 = vunpack.c.l.b16 %v1771
    %v2113 = vunpack.c.h.b16 %v1771
    %v2114 = vunpack.c.l.b16 %v1772
    %v2115 = vunpack.c.h.b16 %v1772
    %v2116 = vunpack.c.l.b16 %v1773
    %v2117 = vunpack.c.h.b16 %v1773
    %v2118 = vunpack.c.l.b16 %v1774
    %v2119 = vunpack.c.h.b16 %v1774
    %v2120 = vunpack.c.l.b16 %v1775
    %v2121 = vunpack.c.h.b16 %v1775
    %v2122 = vunpack.c.l.b16 %v1776
    %v2123 = vunpack.c.h.b16 %v1776
    %v2124 = vunpack.c.l.b16 %v1777
    %v2125 = vunpack.c.h.b16 %v1777
    %v2126 = vunpack.c.l.b16 %v1778
    %v2127 = vunpack.c.h.b16 %v1778
    %v2128 = vunpack.c.l.b16 %v1779
    %v2129 = vunpack.c.h.b16 %v1779
    %v2130 = vunpack.c.l.b16 %v1780
    %v2131 = vunpack.c.h.b16 %v1780
    %v2132 = vunpack.c.l.b16 %v1781
    %v2133 = vunpack.c.h.b16 %v1781
    %v2134 = vunpack.c.l.b16 %v1782
    %v2135 = vunpack.c.h.b16 %v1782
    %v2136 = vunpack.c.l.b16 %v1783
    %v2137 = vunpack.c.h.b16 %v1783
    %v2138 = vunpack.c.l.b16 %v1784
    %v2139 = vunpack.c.h.b16 %v1784
    %v2140 = vunpack.c.l.b16 %v1785
    %v2141 = vunpack.c.h.b16 %v1785
    %v2142 = vunpack.c.l.b16 %v1786
    %v2143 = vunpack.c.h.b16 %v1786
    %v2144 = vunpack.c.l.b16 %v1787
    %v2145 = vunpack.c.h.b16 %v1787
    %v2146 = vunpack.c.l.b16 %v1788
    %v2147 = vunpack.c.h.b16 %v1788
    %v2148 = vunpack.c.l.b16 %v1789
    %v2149 = vunpack.c.h.b16 %v1789
    %v2150 = vunpack.c.l.b16 %v1790
    %v2151 = vunpack.c.h.b16 %v1790
    %v2152 = vunpack.c.l.b16 %v1791
    %v2153 = vunpack.c.h.b16 %v1791
    %v2154 = vunpack.c.l.b16 %v1792
    %v2155 = vunpack.c.h.b16 %v1792
    %v2156 = vunpack.c.l.b16 %v1793
    %v2157 = vunpack.c.h.b16 %v1793
    %v2158 = vunpack.c.l.b16 %v1794
    %v2159 = vunpack.c.h.b16 %v1794
    %v2160 = vunpack.c.l.b16 %v1795
    %v2161 = vunpack.c.h.b16 %v1795
    %v2162 = vunpack.c.l.b16 %v1796
    %v2163 = vunpack.c.h.b16 %v1796
    %v2164 = vunpack.c.l.b16 %v1797
    %v2165 = vunpack.c.h.b16 %v1797
    %v2166 = vunpack.c.l.b16 %v1798
    %v2167 = vunpack.c.h.b16 %v1798
    %v2168 = vunpack.c.l.b16 %v1799
    %v2169 = vunpack.c.h.b16 %v1799
    %v2170 = vunpack.c.l.b16 %v1800
    %v2171 = vunpack.c.h.b16 %v1800
    %v2172 = vunpack.c.l.b16 %v1801
    %v2173 = vunpack.c.h.b16 %v1801
    %v2174 = vunpack.c.l.b16 %v1802
    %v2175 = vunpack.c.h.b16 %v1802
    %v2176 = vunpack.c.l.b16 %v1803
    %v2177 = vunpack.c.h.b16 %v1803
    %v2178 = vunpack.c.l.b16 %v1804
    %v2179 = vunpack.c.h.b16 %v1804
    %v2180 = vunpack.c.l.b16 %v1805
    %v2181 = vunpack.c.h.b16 %v1805
    %v2182 = vunpack.c.l.b16 %v1806
    %v2183 = vunpack.c.h.b16 %v1806
    %v2184 = vunpack.c.l.b16 %v1807
    %v2185 = vunpack.c.h.b16 %v1807
    %v2186 = vunpack.c.l.b16 %v1808
    %v2187 = vunpack.c.h.b16 %v1808
    %v2188 = vunpack.c.l.b16 %v1809
    %v2189 = vunpack.c.h.b16 %v1809
    %v2190 = vunpack.c.l.b16 %v1810
    %v2191 = vunpack.c.h.b16 %v1810
    %v2192 = vunpack.c.l.b16 %v1811
    %v2193 = vunpack.c.h.b16 %v1811
    %v2194 = vunpack.c.l.b16 %v1812
    %v2195 = vunpack.c.h.b16 %v1812
    %v2196 = vunpack.c.l.b16 %v1813
    %v2197 = vunpack.c.h.b16 %v1813
    %v2198 = vunpack.c.l.b16 %v1814
    %v2199 = vunpack.c.h.b16 %v1814
    %v2200 = vunpack.c.l.b16 %v1815
    %v2201 = vunpack.c.h.b16 %v1815
    %v2202 = vunpack.c.l.b16 %v1816
    %v2203 = vunpack.c.h.b16 %v1816
    %v2204 = vunpack.c.l.b16 %v1817
    %v2205 = vunpack.c.h.b16 %v1817
    %v2206 = vunpack.c.l.b16 %v1818
    %v2207 = vunpack.c.h.b16 %v1818
    %v2208 = vunpack.c.l.b16 %v1819
    %v2209 = vunpack.c.h.b16 %v1819
    %v2210 = vunpack.c.l.b16 %v1820
    %v2211 = vunpack.c.h.b16 %v1820
    %v2212 = vunpack.c.l.b16 %v1821
    %v2213 = vunpack.c.h.b16 %v1821
    %v2214 = vunpack.c.l.b16 %v1822
    %v2215 = vunpack.c.h.b16 %v1822
    %v2216 = vunpack.c.l.b16 %v1823
    %v2217 = vunpack.c.h.b16 %v1823
    %v2218 = vunpack.c.l.b16 %v1824
    %v2219 = vunpack.c.h.b16 %v1824
    %v2220 = vunpack.c.l.b16 %v1825
    %v2221 = vunpack.c.h.b16 %v1825
    %v2222 = vunpack.c.l.b16 %v1826
    %v2223 = vunpack.c.h.b16 %v1826
    %v2224 = vunpack.c.l.b16 %v1827
    %v2225 = vunpack.c.h.b16 %v1827
    %v2226 = vunpack.c.l.b16 %v1828
    %v2227 = vunpack.c.h.b16 %v1828
    %v2228 = vunpack.c.l.b16 %v1829
    %v2229 = vunpack.c.h.b16 %v1829
    %v2230 = vunpack.c.l.b16 %v1830
    %v2231 = vunpack.c.h.b16 %v1830
    %v2232 = vunpack.c.l.b16 %v1831
    %v2233 = vunpack.c.h.b16 %v1831
    %v2234 = vunpack.c.l.b16 %v1832
    %v2235 = vunpack.c.h.b16 %v1832
    %v2236 = vunpack.c.l.b16 %v1833
    %v2237 = vunpack.c.h.b16 %v1833
    %v2238 = vunpack.c.l.b16 %v1834
    %v2239 = vunpack.c.h.b16 %v1834
    %v2240 = vunpack.c.l.b16 %v1835
    %v2241 = vunpack.c.h.b16 %v1835
    %v2242 = vpack.c.b16 %v1990, %v1986
    %v2243 = vpack.c.b16 %v1991, %v1987
    %v2244 = vpack.c.b16 %v1992, %v1988
    %v2245 = vpack.c.b16 %v1993, %v1989
    %v2246 = vpack.c.b16 %v1998, %v1994
    %v2247 = vpack.c.b16 %v1999, %v1995
    %v2248 = vpack.c.b16 %v2000, %v1996
    %v2249 = vpack.c.b16 %v2001, %v1997
    %v2250 = vpack.c.b16 %v2006, %v2002
    %v2251 = vpack.c.b16 %v2007, %v2003
    %v2252 = vpack.c.b16 %v2008, %v2004
    %v2253 = vpack.c.b16 %v2009, %v2005
    %v2254 = vpack.c.b16 %v2014, %v2010
    %v2255 = vpack.c.b16 %v2015, %v2011
    %v2256 = vpack.c.b16 %v2016, %v2012
    %v2257 = vpack.c.b16 %v2017, %v2013
    %v2258 = vpack.c.b16 %v2022, %v2018
    %v2259 = vpack.c.b16 %v2023, %v2019
    %v2260 = vpack.c.b16 %v2024, %v2020
    %v2261 = vpack.c.b16 %v2025, %v2021
    %v2262 = vpack.c.b16 %v2030, %v2026
    %v2263 = vpack.c.b16 %v2031, %v2027
    %v2264 = vpack.c.b16 %v2032, %v2028
    %v2265 = vpack.c.b16 %v2033, %v2029
    %v2266 = vpack.c.b16 %v2038, %v2034
    %v2267 = vpack.c.b16 %v2039, %v2035
    %v2268 = vpack.c.b16 %v2040, %v2036
    %v2269 = vpack.c.b16 %v2041, %v2037
    %v2270 = vpack.c.b16 %v2046, %v2042
    %v2271 = vpack.c.b16 %v2047, %v2043
    %v2272 = vpack.c.b16 %v2048, %v2044
    %v2273 = vpack.c.b16 %v2049, %v2045
    %v2274 = vpack.c.b16 %v2054, %v2050
    %v2275 = vpack.c.b16 %v2055, %v2051
    %v2276 = vpack.c.b16 %v2056, %v2052
    %v2277 = vpack.c.b16 %v2057, %v2053
    %v2278 = vpack.c.b16 %v2062, %v2058
    %v2279 = vpack.c.b16 %v2063, %v2059
    %v2280 = vpack.c.b16 %v2064, %v2060
    %v2281 = vpack.c.b16 %v2065, %v2061
    %v2282 = vpack.c.b16 %v2070, %v2066
    %v2283 = vpack.c.b16 %v2071, %v2067
    %v2284 = vpack.c.b16 %v2072, %v2068
    %v2285 = vpack.c.b16 %v2073, %v2069
    %v2286 = vpack.c.b16 %v2078, %v2074
    %v2287 = vpack.c.b16 %v2079, %v2075
    %v2288 = vpack.c.b16 %v2080, %v2076
    %v2289 = vpack.c.b16 %v2081, %v2077
    %v2290 = vpack.c.b16 %v2086, %v2082
    %v2291 = vpack.c.b16 %v2087, %v2083
    %v2292 = vpack.c.b16 %v2088, %v2084
    %v2293 = vpack.c.b16 %v2089, %v2085
    %v2294 = vpack.c.b16 %v2094, %v2090
    %v2295 = vpack.c.b16 %v2095, %v2091
    %v2296 = vpack.c.b16 %v2096, %v2092
    %v2297 = vpack.c.b16 %v2097, %v2093
    %v2298 = vpack.c.b16 %v2102, %v2098
    %v2299 = vpack.c.b16 %v2103, %v2099
    %v2300 = vpack.c.b16 %v2104, %v2100
    %v2301 = vpack.c.b16 %v2105, %v2101
    %v2302 = vpack.c.b16 %v2110, %v2106
    %v2303 = vpack.c.b16 %v2111, %v2107
    %v2304 = vpack.c.b16 %v2112, %v2108
    %v2305 = vpack.c.b16 %v2113, %v2109
    %v2306 = vpack.c.b16 %v2118, %v2114
    %v2307 = vpack.c.b16 %v2119, %v2115
    %v2308 = vpack.c.b16 %v2120, %v2116
    %v2309 = vpack.c.b16 %v2121, %v2117
    %v2310 = vpack.c.b16 %v2126, %v2122
    %v2311 = vpack.c.b16 %v2127, %v2123
    %v2312 = vpack.c.b16 %v2128, %v2124
    %v2313 = vpack.c.b16 %v2129, %v2125
    %v2314 = vpack.c.b16 %v2134, %v2130
    %v2315 = vpack.c.b16 %v2135, %v2131
    %v2316 = vpack.c.b16 %v2136, %v2132
    %v2317 = vpack.c.b16 %v2137, %v2133
    %v2318 = vpack.c.b16 %v2142, %v2138
    %v2319 = vpack.c.b16 %v2143, %v2139
    %v2320 = vpack.c.b16 %v2144, %v2140
    %v2321 = vpack.c.b16 %v2145, %v2141
    %v2322 = vpack.c.b16 %v2150, %v2146
    %v2323 = vpack.c.b16 %v2151, %v2147
    %v2324 = vpack.c.b16 %v2152, %v2148
    %v2325 = vpack.c.b16 %v2153, %v2149
    %v2326 = vpack.c.b16 %v2158, %v2154
    %v2327 = vpack.c.b16 %v2159, %v2155
    %v2328 = vpack.c.b16 %v2160, %v2156
    %v2329 = vpack.c.b16 %v2161, %v2157
    %v2330 = vpack.c.b16 %v2166, %v2162
    %v2331 = vpack.c.b16 %v2167, %v2163
    %v2332 = vpack.c.b16 %v2168, %v2164
    %v2333 = vpack.c.b16 %v2169, %v2165
    %v2334 = vpack.c.b16 %v2174, %v2170
    %v2335 = vpack.c.b16 %v2175, %v2171
    %v2336 = vpack.c.b16 %v2176, %v2172
    %v2337 = vpack.c.b16 %v2177, %v2173
    %v2338 = vpack.c.b16 %v2182, %v2178
    %v2339 = vpack.c.b16 %v2183, %v2179
    %v2340 = vpack.c.b16 %v2184, %v2180
    %v2341 = vpack.c.b16 %v2185, %v2181
    %v2342 = vpack.c.b16 %v2190, %v2186
    %v2343 = vpack.c.b16 %v2191, %v2187
    %v2344 = vpack.c.b16 %v2192, %v2188
    %v2345 = vpack.c.b16 %v2193, %v2189
    %v2346 = vpack.c.b16 %v2198, %v2194
    %v2347 = vpack.c.b16 %v2199, %v2195
    %v2348 = vpack.c.b16 %v2200, %v2196
    %v2349 = vpack.c.b16 %v2201, %v2197
    %v2350 = vpack.c.b16 %v2206, %v2202
    %v2351 = vpack.c.b16 %v2207, %v2203
    %v2352 = vpack.c.b16 %v2208, %v2204
    %v2353 = vpack.c.b16 %v2209, %v2205
    %v2354 = vpack.c.b16 %v2214, %v2210
    %v2355 = vpack.c.b16 %v2215, %v2211
    %v2356 = vpack.c.b16 %v2216, %v2212
    %v2357 = vpack.c.b16 %v2217, %v2213
    %v2358 = vpack.c.b16 %v2222, %v2218
    %v2359 = vpack.c.b16 %v2223, %v2219
    %v2360 = vpack.c.b16 %v2224, %v2220
    %v2361 = vpack.c.b16 %v2225, %v2221
    %v2362 = vpack.c.b16 %v2230, %v2226
    %v2363 = vpack.c.b16 %v2231, %v2227
    %v2364 = vpack.c.b16 %v2232, %v2228
    %v2365 = vpack.c.b16 %v2233, %v2229
    %v2366 = vpack.c.b16 %v2238, %v2234
    %v2367 = vpack.c.b16 %v2239, %v2235
    %v2368 = vpack.c.b16 %v2240, %v2236
    %v2369 = vpack.c.b16 %v2241, %v2237
    %2498 = vmatprep.subr.bf16.mxu0 %v2243
    %2499 = vmatpush1.bf16.msra.mxu0 %v2242
    %2500 = vmatprep.subr.bf16.mxu0 %v2247
    %2501 = vmatpush1.bf16.msra.mxu0 %v2246
    %2502 = vmatprep.subr.bf16.mxu0 %v2251
    %2503 = vmatpush1.bf16.msra.mxu0 %v2250
    %2504 = vmatprep.subr.bf16.mxu0 %v2255
    %2505 = vmatpush1.bf16.msra.mxu0 %v2254
    %2506 = vmatprep.subr.bf16.mxu0 %v2259
    %2507 = vmatpush1.bf16.msra.mxu0 %v2258
    %2508 = vmatprep.subr.bf16.mxu0 %v2263
    %2509 = vmatpush1.bf16.msra.mxu0 %v2262
    %2510 = vmatprep.subr.bf16.mxu0 %v2267
    %2511 = vmatpush1.bf16.msra.mxu0 %v2266
    %2512 = vmatprep.subr.bf16.mxu0 %v2271
    %2513 = vmatpush1.bf16.msra.mxu0 %v2270
    %2514 = vmatprep.subr.bf16.mxu0 %v2275
    %2515 = vmatpush1.bf16.msra.mxu0 %v2274
    %2516 = vmatprep.subr.bf16.mxu0 %v2279
    %2517 = vmatpush1.bf16.msra.mxu0 %v2278
    %2518 = vmatprep.subr.bf16.mxu0 %v2283
    %2519 = vmatpush1.bf16.msra.mxu0 %v2282
    %2520 = vmatprep.subr.bf16.mxu0 %v2287
    %2521 = vmatpush1.bf16.msra.mxu0 %v2286
    %2522 = vmatprep.subr.bf16.mxu0 %v2291
    %2523 = vmatpush1.bf16.msra.mxu0 %v2290
    %2524 = vmatprep.subr.bf16.mxu0 %v2295
    %2525 = vmatpush1.bf16.msra.mxu0 %v2294
    %2526 = vmatprep.subr.bf16.mxu0 %v2299
    %2527 = vmatpush1.bf16.msra.mxu0 %v2298
    %2528 = vmatprep.subr.bf16.mxu0 %v2303
    %2529 = vmatpush1.bf16.msra.mxu0 %v2302
    %2530 = vmatprep.mubr.bf16.mxu0 %v1705
    %2531 = vmatmul.mubr.bf16.gmra.mrb[0].mxu0 %v1704
    %v2532 = vpop.f32.mrb[0].mxu0
    %v2533 = vadd.f32 %v1841, %v2532
    %v2534 = vpop.f32.mrb[0].mxu0
    %v2535 = vadd.f32 %v1845, %v2534
    %v2536 = vpop.f32.mrb[0].mxu0
    %v2537 = vpop.f32.mrb[0].mxu0
    %2538 = vdwg.mxu0
    %2539 = vmatprep.subr.bf16.mxu0 %v2307
    %2540 = vmatpush1.bf16.msra.mxu0 %v2306
    %2541 = vmatprep.subr.bf16.mxu0 %v2311
    %2542 = vmatpush1.bf16.msra.mxu0 %v2310
    %2543 = vmatprep.subr.bf16.mxu0 %v2315
    %2544 = vmatpush1.bf16.msra.mxu0 %v2314
    %2545 = vmatprep.subr.bf16.mxu0 %v2319
    %2546 = vmatpush1.bf16.msra.mxu0 %v2318
    %2547 = vmatprep.subr.bf16.mxu0 %v2323
    %2548 = vmatpush1.bf16.msra.mxu0 %v2322
    %2549 = vmatprep.subr.bf16.mxu0 %v2327
    %2550 = vmatpush1.bf16.msra.mxu0 %v2326
    %2551 = vmatprep.subr.bf16.mxu0 %v2331
    %2552 = vmatpush1.bf16.msra.mxu0 %v2330
    %2553 = vmatprep.subr.bf16.mxu0 %v2335
    %2554 = vmatpush1.bf16.msra.mxu0 %v2334
    %2555 = vmatprep.subr.bf16.mxu0 %v2339
    %2556 = vmatpush1.bf16.msra.mxu0 %v2338
    %2557 = vmatprep.subr.bf16.mxu0 %v2343
    %2558 = vmatpush1.bf16.msra.mxu0 %v2342
    %2559 = vmatprep.subr.bf16.mxu0 %v2347
    %2560 = vmatpush1.bf16.msra.mxu0 %v2346
    %2561 = vmatprep.subr.bf16.mxu0 %v2351
    %2562 = vmatpush1.bf16.msra.mxu0 %v2350
    %2563 = vmatprep.subr.bf16.mxu0 %v2355
    %2564 = vmatpush1.bf16.msra.mxu0 %v2354
    %2565 = vmatprep.subr.bf16.mxu0 %v2359
    %2566 = vmatpush1.bf16.msra.mxu0 %v2358
    %2567 = vmatprep.subr.bf16.mxu0 %v2363
    %2568 = vmatpush1.bf16.msra.mxu0 %v2362
    %2569 = vmatprep.subr.bf16.mxu0 %v2367
    %2570 = vmatpush1.bf16.msra.mxu0 %v2366
    %2571 = vmatprep.mubr.bf16.mxu0 %v1707
    %2572 = vmatmul.mubr.bf16.gmra.mrb[0].mxu0 %v1706
    %v2573 = vpop.f32.mrb[0].mxu0
    %v2574 = vadd.f32 %v2533, %v2573
    %v2575 = vpop.f32.mrb[0].mxu0
    %v2576 = vadd.f32 %v2535, %v2575
    %v2577 = vpop.f32.mrb[0].mxu0
    %v2578 = vpop.f32.mrb[0].mxu0
    %2579 = vdwg.mxu0
    %2580 = vmatprep.subr.bf16.mxu0 %v2245
    %2581 = vmatpush1.bf16.msra.mxu0 %v2244
    %2582 = vmatprep.subr.bf16.mxu0 %v2249
    %2583 = vmatpush1.bf16.msra.mxu0 %v2248
    %2584 = vmatprep.subr.bf16.mxu0 %v2253
    %2585 = vmatpush1.bf16.msra.mxu0 %v2252
    %2586 = vmatprep.subr.bf16.mxu0 %v2257
    %2587 = vmatpush1.bf16.msra.mxu0 %v2256
    %2588 = vmatprep.subr.bf16.mxu0 %v2261
    %2589 = vmatpush1.bf16.msra.mxu0 %v2260
    %2590 = vmatprep.subr.bf16.mxu0 %v2265
    %2591 = vmatpush1.bf16.msra.mxu0 %v2264
    %2592 = vmatprep.subr.bf16.mxu0 %v2269
    %2593 = vmatpush1.bf16.msra.mxu0 %v2268
    %2594 = vmatprep.subr.bf16.mxu0 %v2273
    %2595 = vmatpush1.bf16.msra.mxu0 %v2272
    %2596 = vmatprep.subr.bf16.mxu0 %v2277
    %2597 = vmatpush1.bf16.msra.mxu0 %v2276
    %2598 = vmatprep.subr.bf16.mxu0 %v2281
    %2599 = vmatpush1.bf16.msra.mxu0 %v2280
    %2600 = vmatprep.subr.bf16.mxu0 %v2285
    %2601 = vmatpush1.bf16.msra.mxu0 %v2284
    %2602 = vmatprep.subr.bf16.mxu0 %v2289
    %2603 = vmatpush1.bf16.msra.mxu0 %v2288
    %2604 = vmatprep.subr.bf16.mxu0 %v2293
    %2605 = vmatpush1.bf16.msra.mxu0 %v2292
    %2606 = vmatprep.subr.bf16.mxu0 %v2297
    %2607 = vmatpush1.bf16.msra.mxu0 %v2296
    %2608 = vmatprep.subr.bf16.mxu0 %v2301
    %2609 = vmatpush1.bf16.msra.mxu0 %v2300
    %2610 = vmatprep.subr.bf16.mxu0 %v2305
    %2611 = vmatpush1.bf16.msra.mxu0 %v2304
    %2612 = vmatprep.mubr.bf16.mxu0 %v1705
    %2613 = vmatmul.mubr.bf16.gmra.mrb[0].mxu0 %v1704
    %v2614 = vpop.f32.mrb[0].mxu0
    %v2615 = vadd.f32 %v1849, %v2614
    %v2616 = vpop.f32.mrb[0].mxu0
    %v2617 = vadd.f32 %v1853, %v2616
    %v2618 = vpop.f32.mrb[0].mxu0
    %v2619 = vpop.f32.mrb[0].mxu0
    %2620 = vdwg.mxu0
    %2621 = vmatprep.subr.bf16.mxu0 %v2309
    %2622 = vmatpush1.bf16.msra.mxu0 %v2308
    %2623 = vmatprep.subr.bf16.mxu0 %v2313
    %2624 = vmatpush1.bf16.msra.mxu0 %v2312
    %2625 = vmatprep.subr.bf16.mxu0 %v2317
    %2626 = vmatpush1.bf16.msra.mxu0 %v2316
    %2627 = vmatprep.subr.bf16.mxu0 %v2321
    %2628 = vmatpush1.bf16.msra.mxu0 %v2320
    %2629 = vmatprep.subr.bf16.mxu0 %v2325
    %2630 = vmatpush1.bf16.msra.mxu0 %v2324
    %2631 = vmatprep.subr.bf16.mxu0 %v2329
    %2632 = vmatpush1.bf16.msra.mxu0 %v2328
    %2633 = vmatprep.subr.bf16.mxu0 %v2333
    %2634 = vmatpush1.bf16.msra.mxu0 %v2332
    %2635 = vmatprep.subr.bf16.mxu0 %v2337
    %2636 = vmatpush1.bf16.msra.mxu0 %v2336
    %2637 = vmatprep.subr.bf16.mxu0 %v2341
    %2638 = vmatpush1.bf16.msra.mxu0 %v2340
    %2639 = vmatprep.subr.bf16.mxu0 %v2345
    %2640 = vmatpush1.bf16.msra.mxu0 %v2344
    %2641 = vmatprep.subr.bf16.mxu0 %v2349
    %2642 = vmatpush1.bf16.msra.mxu0 %v2348
    %2643 = vmatprep.subr.bf16.mxu0 %v2353
    %2644 = vmatpush1.bf16.msra.mxu0 %v2352
    %2645 = vmatprep.subr.bf16.mxu0 %v2357
    %2646 = vmatpush1.bf16.msra.mxu0 %v2356
    %2647 = vmatprep.subr.bf16.mxu0 %v2361
    %2648 = vmatpush1.bf16.msra.mxu0 %v2360
    %2649 = vmatprep.subr.bf16.mxu0 %v2365
    %2650 = vmatpush1.bf16.msra.mxu0 %v2364
    %2651 = vmatprep.subr.bf16.mxu0 %v2369
    %2652 = vmatpush1.bf16.msra.mxu0 %v2368
    %2653 = vmatprep.mubr.bf16.mxu0 %v1707
    %2654 = vmatmul.mubr.bf16.gmra.mrb[0].mxu0 %v1706
    %v2655 = vpop.f32.mrb[0].mxu0
    %v2656 = vadd.f32 %v2615, %v2655
    %v2657 = vpop.f32.mrb[0].mxu0
    %v2658 = vadd.f32 %v2617, %v2657
    %v2659 = vpop.f32.mrb[0].mxu0
    %v2660 = vpop.f32.mrb[0].mxu0
    %2661 = vdwg.mxu0
    %v2662 = vmax.f32 %v2574, 0.0
    %v2663 = vmax.f32 %v2576, 0.0
    %v2664 = vmax.f32 %v2656, 0.0
    %v2665 = vmax.f32 %v2658, 0.0
    %v2666 = vpack.c.bf16 %v2662, %v2662
    %v2667 = vpack.c.bf16 %v2663, %v2663
    %v2668 = vpack.c.bf16 %v2664, %v2664
    %v2669 = vpack.c.bf16 %v2665, %v2665
    %v2670 = vld [vmem:[#allocation7] sm:$0xf]
    %v2671 = vld [vmem:[#allocation7 + $0x4] sm:$0xf]
    %v2672 = vld [vmem:[#allocation7 + $0x8] sm:$0xf]
    %v2673 = vld [vmem:[#allocation7 + $0xc] sm:$0xf]
    %v2674 = vld [vmem:[#allocation7 + $0x10] sm:$0xf]
    %v2675 = vld [vmem:[#allocation7 + $0x14] sm:$0xf]
    %v2676 = vld [vmem:[#allocation7 + $0x18] sm:$0xf]
    %v2677 = vld [vmem:[#allocation7 + $0x1c] sm:$0xf]
    %v2678 = vld [vmem:[#allocation7 + $0x20] sm:$0xf]
    %v2679 = vld [vmem:[#allocation7 + $0x24] sm:$0xf]
    %v2680 = vld [vmem:[#allocation7 + $0x28] sm:$0xf]
    %v2681 = vld [vmem:[#allocation7 + $0x2c] sm:$0xf]
    %v2682 = vld [vmem:[#allocation7 + $0x30] sm:$0xf]
    %v2683 = vld [vmem:[#allocation7 + $0x34] sm:$0xf]
    %v2684 = vld [vmem:[#allocation7 + $0x38] sm:$0xf]
    %v2685 = vld [vmem:[#allocation7 + $0x3c] sm:$0xf]
    %v2686 = vld [vmem:[#allocation7 + $0x40] sm:$0xf]
    %v2687 = vld [vmem:[#allocation7 + $0x44] sm:$0xf]
    %v2688 = vld [vmem:[#allocation7 + $0x48] sm:$0xf]
    %v2689 = vld [vmem:[#allocation7 + $0x4c] sm:$0xf]
    %v2690 = vld [vmem:[#allocation7 + $0x50] sm:$0xf]
    %v2691 = vld [vmem:[#allocation7 + $0x54] sm:$0xf]
    %v2692 = vld [vmem:[#allocation7 + $0x58] sm:$0xf]
    %v2693 = vld [vmem:[#allocation7 + $0x5c] sm:$0xf]
    %v2694 = vld [vmem:[#allocation7 + $0x60] sm:$0xf]
    %v2695 = vld [vmem:[#allocation7 + $0x64] sm:$0xf]
    %v2696 = vld [vmem:[#allocation7 + $0x68] sm:$0xf]
    %v2697 = vld [vmem:[#allocation7 + $0x6c] sm:$0xf]
    %v2698 = vld [vmem:[#allocation7 + $0x70] sm:$0xf]
    %v2699 = vld [vmem:[#allocation7 + $0x74] sm:$0xf]
    %v2700 = vld [vmem:[#allocation7 + $0x78] sm:$0xf]
    %v2701 = vld [vmem:[#allocation7 + $0x7c] sm:$0xf]
    %v2702 = vld [vmem:[#allocation7 + $0x80] sm:$0xf]
    %v2703 = vld [vmem:[#allocation7 + $0x84] sm:$0xf]
    %v2704 = vld [vmem:[#allocation7 + $0x88] sm:$0xf]
    %v2705 = vld [vmem:[#allocation7 + $0x8c] sm:$0xf]
    %v2706 = vld [vmem:[#allocation7 + $0x90] sm:$0xf]
    %v2707 = vld [vmem:[#allocation7 + $0x94] sm:$0xf]
    %v2708 = vld [vmem:[#allocation7 + $0x98] sm:$0xf]
    %v2709 = vld [vmem:[#allocation7 + $0x9c] sm:$0xf]
    %v2710 = vld [vmem:[#allocation7 + $0xa0] sm:$0xf]
    %v2711 = vld [vmem:[#allocation7 + $0xa4] sm:$0xf]
    %v2712 = vld [vmem:[#allocation7 + $0xa8] sm:$0xf]
    %v2713 = vld [vmem:[#allocation7 + $0xac] sm:$0xf]
    %v2714 = vld [vmem:[#allocation7 + $0xb0] sm:$0xf]
    %v2715 = vld [vmem:[#allocation7 + $0xb4] sm:$0xf]
    %v2716 = vld [vmem:[#allocation7 + $0xb8] sm:$0xf]
    %v2717 = vld [vmem:[#allocation7 + $0xbc] sm:$0xf]
    %v2718 = vld [vmem:[#allocation7 + $0xc0] sm:$0xf]
    %v2719 = vld [vmem:[#allocation7 + $0xc4] sm:$0xf]
    %v2720 = vld [vmem:[#allocation7 + $0xc8] sm:$0xf]
    %v2721 = vld [vmem:[#allocation7 + $0xcc] sm:$0xf]
    %v2722 = vld [vmem:[#allocation7 + $0xd0] sm:$0xf]
    %v2723 = vld [vmem:[#allocation7 + $0xd4] sm:$0xf]
    %v2724 = vld [vmem:[#allocation7 + $0xd8] sm:$0xf]
    %v2725 = vld [vmem:[#allocation7 + $0xdc] sm:$0xf]
    %v2726 = vld [vmem:[#allocation7 + $0xe0] sm:$0xf]
    %v2727 = vld [vmem:[#allocation7 + $0xe4] sm:$0xf]
    %v2728 = vld [vmem:[#allocation7 + $0xe8] sm:$0xf]
    %v2729 = vld [vmem:[#allocation7 + $0xec] sm:$0xf]
    %v2730 = vld [vmem:[#allocation7 + $0xf0] sm:$0xf]
    %v2731 = vld [vmem:[#allocation7 + $0xf4] sm:$0xf]
    %v2732 = vld [vmem:[#allocation7 + $0xf8] sm:$0xf]
    %v2733 = vld [vmem:[#allocation7 + $0xfc] sm:$0xf]
    %v2734 = vld [vmem:[%s6] sm:$0x1]
    %v2736 = vlaneseq
    %v2737 = vshrl.u32 %v2736, 7
    %v2738 = vsub.s32 0, %v2737
    %v2739 = vrot.slane %v2734, %v2738
    %v2805 = vunpack.c.l.b16 %v2670
    %v2806 = vunpack.c.l.b16 %v2671
    %v2807 = vunpack.c.l.b16 %v2672
    %v2808 = vunpack.c.l.b16 %v2673
    %v2809 = vunpack.c.l.b16 %v2674
    %v2810 = vunpack.c.l.b16 %v2675
    %v2811 = vunpack.c.l.b16 %v2676
    %v2812 = vunpack.c.l.b16 %v2677
    %v2813 = vunpack.c.l.b16 %v2678
    %v2814 = vunpack.c.l.b16 %v2679
    %v2815 = vunpack.c.l.b16 %v2680
    %v2816 = vunpack.c.l.b16 %v2681
    %v2817 = vunpack.c.l.b16 %v2682
    %v2818 = vunpack.c.l.b16 %v2683
    %v2819 = vunpack.c.l.b16 %v2684
    %v2820 = vunpack.c.l.b16 %v2685
    %v2821 = vunpack.c.l.b16 %v2686
    %v2822 = vunpack.c.l.b16 %v2687
    %v2823 = vunpack.c.l.b16 %v2688
    %v2824 = vunpack.c.l.b16 %v2689
    %v2825 = vunpack.c.l.b16 %v2690
    %v2826 = vunpack.c.l.b16 %v2691
    %v2827 = vunpack.c.l.b16 %v2692
    %v2828 = vunpack.c.l.b16 %v2693
    %v2829 = vunpack.c.l.b16 %v2694
    %v2830 = vunpack.c.l.b16 %v2695
    %v2831 = vunpack.c.l.b16 %v2696
    %v2832 = vunpack.c.l.b16 %v2697
    %v2833 = vunpack.c.l.b16 %v2698
    %v2834 = vunpack.c.l.b16 %v2699
    %v2835 = vunpack.c.l.b16 %v2700
    %v2836 = vunpack.c.l.b16 %v2701
    %v2837 = vunpack.c.l.b16 %v2702
    %v2838 = vunpack.c.l.b16 %v2703
    %v2839 = vunpack.c.l.b16 %v2704
    %v2840 = vunpack.c.l.b16 %v2705
    %v2841 = vunpack.c.l.b16 %v2706
    %v2842 = vunpack.c.l.b16 %v2707
    %v2843 = vunpack.c.l.b16 %v2708
    %v2844 = vunpack.c.l.b16 %v2709
    %v2845 = vunpack.c.l.b16 %v2710
    %v2846 = vunpack.c.l.b16 %v2711
    %v2847 = vunpack.c.l.b16 %v2712
    %v2848 = vunpack.c.l.b16 %v2713
    %v2849 = vunpack.c.l.b16 %v2714
    %v2850 = vunpack.c.l.b16 %v2715
    %v2851 = vunpack.c.l.b16 %v2716
    %v2852 = vunpack.c.l.b16 %v2717
    %v2853 = vunpack.c.l.b16 %v2718
    %v2854 = vunpack.c.l.b16 %v2719
    %v2855 = vunpack.c.l.b16 %v2720
    %v2856 = vunpack.c.l.b16 %v2721
    %v2857 = vunpack.c.l.b16 %v2722
    %v2858 = vunpack.c.l.b16 %v2723
    %v2859 = vunpack.c.l.b16 %v2724
    %v2860 = vunpack.c.l.b16 %v2725
    %v2861 = vunpack.c.l.b16 %v2726
    %v2862 = vunpack.c.l.b16 %v2727
    %v2863 = vunpack.c.l.b16 %v2728
    %v2864 = vunpack.c.l.b16 %v2729
    %v2865 = vunpack.c.l.b16 %v2730
    %v2866 = vunpack.c.l.b16 %v2731
    %v2867 = vunpack.c.l.b16 %v2732
    %v2868 = vunpack.c.l.b16 %v2733
    %v2869 = vpack.c.b16 %v2806, %v2805
    %v2870 = vpack.c.b16 %v2808, %v2807
    %v2871 = vpack.c.b16 %v2810, %v2809
    %v2872 = vpack.c.b16 %v2812, %v2811
    %v2873 = vpack.c.b16 %v2814, %v2813
    %v2874 = vpack.c.b16 %v2816, %v2815
    %v2875 = vpack.c.b16 %v2818, %v2817
    %v2876 = vpack.c.b16 %v2820, %v2819
    %v2877 = vpack.c.b16 %v2822, %v2821
    %v2878 = vpack.c.b16 %v2824, %v2823
    %v2879 = vpack.c.b16 %v2826, %v2825
    %v2880 = vpack.c.b16 %v2828, %v2827
    %v2881 = vpack.c.b16 %v2830, %v2829
    %v2882 = vpack.c.b16 %v2832, %v2831
    %v2883 = vpack.c.b16 %v2834, %v2833
    %v2884 = vpack.c.b16 %v2836, %v2835
    %v2885 = vpack.c.b16 %v2838, %v2837
    %v2886 = vpack.c.b16 %v2840, %v2839
    %v2887 = vpack.c.b16 %v2842, %v2841
    %v2888 = vpack.c.b16 %v2844, %v2843
    %v2889 = vpack.c.b16 %v2846, %v2845
    %v2890 = vpack.c.b16 %v2848, %v2847
    %v2891 = vpack.c.b16 %v2850, %v2849
    %v2892 = vpack.c.b16 %v2852, %v2851
    %v2893 = vpack.c.b16 %v2854, %v2853
    %v2894 = vpack.c.b16 %v2856, %v2855
    %v2895 = vpack.c.b16 %v2858, %v2857
    %v2896 = vpack.c.b16 %v2860, %v2859
    %v2897 = vpack.c.b16 %v2862, %v2861
    %v2898 = vpack.c.b16 %v2864, %v2863
    %v2899 = vpack.c.b16 %v2866, %v2865
    %v2900 = vpack.c.b16 %v2868, %v2867
    %2933 = vmatprep.subr.bf16.mxu0 0
    %2934 = vmatpush1.bf16.msra.mxu0 %v2869
    %2935 = vmatprep.subr.bf16.mxu0 0
    %2936 = vmatpush1.bf16.msra.mxu0 %v2870
    %2937 = vmatprep.subr.bf16.mxu0 0
    %2938 = vmatpush1.bf16.msra.mxu0 %v2871
    %2939 = vmatprep.subr.bf16.mxu0 0
    %2940 = vmatpush1.bf16.msra.mxu0 %v2872
    %2941 = vmatprep.subr.bf16.mxu0 0
    %2942 = vmatpush1.bf16.msra.mxu0 %v2873
    %2943 = vmatprep.subr.bf16.mxu0 0
    %2944 = vmatpush1.bf16.msra.mxu0 %v2874
    %2945 = vmatprep.subr.bf16.mxu0 0
    %2946 = vmatpush1.bf16.msra.mxu0 %v2875
    %2947 = vmatprep.subr.bf16.mxu0 0
    %2948 = vmatpush1.bf16.msra.mxu0 %v2876
    %2949 = vmatprep.subr.bf16.mxu0 0
    %2950 = vmatpush1.bf16.msra.mxu0 %v2877
    %2951 = vmatprep.subr.bf16.mxu0 0
    %2952 = vmatpush1.bf16.msra.mxu0 %v2878
    %2953 = vmatprep.subr.bf16.mxu0 0
    %2954 = vmatpush1.bf16.msra.mxu0 %v2879
    %2955 = vmatprep.subr.bf16.mxu0 0
    %2956 = vmatpush1.bf16.msra.mxu0 %v2880
    %2957 = vmatprep.subr.bf16.mxu0 0
    %2958 = vmatpush1.bf16.msra.mxu0 %v2881
    %2959 = vmatprep.subr.bf16.mxu0 0
    %2960 = vmatpush1.bf16.msra.mxu0 %v2882
    %2961 = vmatprep.subr.bf16.mxu0 0
    %2962 = vmatpush1.bf16.msra.mxu0 %v2883
    %2963 = vmatprep.subr.bf16.mxu0 0
    %2964 = vmatpush1.bf16.msra.mxu0 %v2884
    %2965 = vmatprep.mubr.bf16.mxu0 %v2667
    %2966 = vmatmul.mubr.bf16.gmra.mrb[0].mxu0 %v2666
    %v2967 = vpop.f32.mrb[0].mxu0
    %v2968 = vadd.f32 %v2739, %v2967
    %v2969 = vpop.f32.mrb[0].mxu0
    %v2970 = vpop.f32.mrb[0].mxu0
    %v2971 = vpop.f32.mrb[0].mxu0
    %2972 = vdwg.mxu0
    %2973 = vmatprep.subr.bf16.mxu0 0
    %2974 = vmatpush1.bf16.msra.mxu0 %v2885
    %2975 = vmatprep.subr.bf16.mxu0 0
    %2976 = vmatpush1.bf16.msra.mxu0 %v2886
    %2977 = vmatprep.subr.bf16.mxu0 0
    %2978 = vmatpush1.bf16.msra.mxu0 %v2887
    %2979 = vmatprep.subr.bf16.mxu0 0
    %2980 = vmatpush1.bf16.msra.mxu0 %v2888
    %2981 = vmatprep.subr.bf16.mxu0 0
    %2982 = vmatpush1.bf16.msra.mxu0 %v2889
    %2983 = vmatprep.subr.bf16.mxu0 0
    %2984 = vmatpush1.bf16.msra.mxu0 %v2890
    %2985 = vmatprep.subr.bf16.mxu0 0
    %2986 = vmatpush1.bf16.msra.mxu0 %v2891
    %2987 = vmatprep.subr.bf16.mxu0 0
    %2988 = vmatpush1.bf16.msra.mxu0 %v2892
    %2989 = vmatprep.subr.bf16.mxu0 0
    %2990 = vmatpush1.bf16.msra.mxu0 %v2893
    %2991 = vmatprep.subr.bf16.mxu0 0
    %2992 = vmatpush1.bf16.msra.mxu0 %v2894
    %2993 = vmatprep.subr.bf16.mxu0 0
    %2994 = vmatpush1.bf16.msra.mxu0 %v2895
    %2995 = vmatprep.subr.bf16.mxu0 0
    %2996 = vmatpush1.bf16.msra.mxu0 %v2896
    %2997 = vmatprep.subr.bf16.mxu0 0
    %2998 = vmatpush1.bf16.msra.mxu0 %v2897
    %2999 = vmatprep.subr.bf16.mxu0 0
    %3000 = vmatpush1.bf16.msra.mxu0 %v2898
    %3001 = vmatprep.subr.bf16.mxu0 0
    %3002 = vmatpush1.bf16.msra.mxu0 %v2899
    %3003 = vmatprep.subr.bf16.mxu0 0
    %3004 = vmatpush1.bf16.msra.mxu0 %v2900
    %3005 = vmatprep.mubr.bf16.mxu0 %v2669
    %3006 = vmatmul.mubr.bf16.gmra.mrb[0].mxu0 %v2668
    %v3007 = vpop.f32.mrb[0].mxu0
    %v3008 = vadd.f32 %v2968, %v3007
    %v3009 = vpop.f32.mrb[0].mxu0
    %v3010 = vpop.f32.mrb[0].mxu0
    %v3011 = vpop.f32.mrb[0].mxu0
    %3012 = vdwg.mxu0
    %3013 = vst [vmem:[#allocation8] sm:$0xff] %v3008
    // Predicated region
    $region42: #{neural_network_forward.1} parent=1 // pred_check
      _
    $region43: #{neural_network_forward.1} parent=1 // pred_check_branch
      %3015 = sbr.rel (0) target = $region45
    $region44: #{neural_network_forward.1} parent=1 // pred_region
      %s3017 = ssub.s32 128, 32
      %3018 = vsyncadd [#allocation4], %s3017
      %s3019 = sshll.u32 [#allocation8], 4
      %s3020 = int_to_ptr.vmem [resolvable:$true] %s3019
      %3025 = dma.vmem_to_hbm [thread:$0]  %s3020, 32, %s7, [#allocation4], 32, 32, 2
    $region45: #{neural_network_forward.1} parent=1 // pred_fallthru
      _
    // Predicated region
    $region46: #{neural_network_forward.1} parent=1 // pred_check
      _
    $region47: #{neural_network_forward.1} parent=1 // pred_check_branch
      %3027 = sbr.rel (0) target = $region49
    $region48: #{neural_network_forward.1} parent=1 // pred_region
      %3028 = dma.done [#allocation4], 128
    $region49: #{neural_network_forward.1} parent=1 // pred_fallthru
      _
    %3029 = vsyncpa [#allocation3], 1
    %3030 = vsyncpa [#allocation6], 1
    %3031 = vsyncpa [#allocation4], 1

</llo_original>
